<compile_context>
chip_gen: v7x
topology: tpu7x:2x2x1
jax: 0.10.0
libtpu: 0.0.40
codegen_flags: <defaults>
</compile_context>

<pallas_src>
import jax
import jax.numpy as jnp
from jax import lax
from jax.experimental import pallas as pl
from jax.experimental.pallas import tpu as pltpu

KSIZE = 7
PAD = (KSIZE - 1) // 2
_TARGET_IN_BUF_BYTES = 8 * 1024 * 1024   # per input buffer (Pallas double-buffers)


def _round_up(a, b):
    return -(-a // b) * b


def _divisors(n):
    return [d for d in range(1, n + 1) if n % d == 0]


def _physical_vmem_bytes():
    try:
        info = pltpu.get_tpu_info()
        v = getattr(info, "vmem_capacity_bytes", None)
        if v:
            return int(v)
    except Exception:
        pass
    return 64 * 1024 * 1024              # conservative: v7x has 64 MiB / TensorCore


def _num_tensorcores():
    try:
        dev = jax.devices()[0]
        for attr in ("num_cores", "core_count"):
            v = getattr(dev, attr, None)
            if isinstance(v, int) and 0 < v <= 16:
                return v
    except Exception:
        pass
    return 1


def _plan_blocks(N, C, HW, itemsize, plan_cap, block_n, block_c, n_cores):
    """Pick (block_n, block_c) from padded *physical* VMEM footprints."""
    sub = max(8, 32 // max(1, itemsize))          # native sublane multiple for dtype
    lane = _round_up(max(HW, 1), 128)
    lane_f32b = lane * 4

    def in_buf(nb, ct):                           # one (nb, ct, HW) input buffer
        return nb * _round_up(ct, sub) * lane * itemsize

    def plan_bytes(nb, ct):
        out_win = nb * 8 * lane * itemsize * 2                         # (nb,1,HW) window
        scr = (2 * _round_up(nb, 8) * lane_f32b) if ct < C else 0      # sum/max scratch
        col = 2 * 8 * lane * 4                                         # (1,HW) col ids
        work = 12 * _round_up(nb, 8) * lane_f32b                       # conv temporaries
        return 2 * in_buf(nb, ct) + out_win + scr + col + work

    ct_opts = [c for c in _divisors(C) if c % sub == 0 or c == C]
    nb_opts = _divisors(N)
    if block_c is not None:
        assert C % block_c == 0 and (block_c % sub == 0 or block_c == C), (
            f"block_c must divide C={C} and be a multiple of {sub} (or equal C)")
        ct_opts = [block_c]
    if block_n is not None:
        assert N % block_n == 0, f"block_n must divide N={N}"
        nb_opts = [block_n]

    feasible = [(nb, ct) for nb in nb_opts for ct in ct_opts
                if plan_bytes(nb, ct) <= plan_cap]
    if not feasible:
        # TODO(synk): spatial tiling with a 3-row halo for enormous H*W.
        nb, ct = min(nb_opts), min(ct_opts)
        return nb, ct, plan_bytes(nb, ct)

    def score(nc):
        nb, ct = nc
        dma = min(in_buf(nb, ct), _TARGET_IN_BUF_BYTES)     # DMA efficiency
        both_cores = 1 if (N == 1 or (N // nb) >= 2) else 0
        if n_cores >= 2:
            # keep both TensorCores busy (v7x) before maximizing block size
            return (both_cores, dma, nb * ct)
        # single TensorCore (v5e / v6e): take the biggest block that fits
        return (dma, nb * ct, both_cores)

    nb, ct = max(feasible, key=score)
    return nb, ct, plan_bytes(nb, ct)


def _make_kernel(Nb, Ct, H, W, n_csteps):
    HW = H * W
    K = KSIZE

    # ---- streaming channel reduction over the (Nb, Ct, HW) block -------------
    CK = 8 if Ct >= 8 else Ct                 # channels folded per step
    n_full = Ct // CK
    rem = Ct - n_full * CK

    def _reduce_block(x_ref):
        first = x_ref[:, 0:CK, :].astype(jnp.float32)            # (Nb, CK, HW)
        s = jnp.sum(first, axis=1)
        m = jnp.max(first, axis=1)
        if n_full > 1:
            def body(i, carry):
                cs, cm = carry
                off = pl.multiple_of(i * CK, CK)
                chunk = x_ref[:, pl.ds(off, CK), :].astype(jnp.float32)
                return (cs + jnp.sum(chunk, axis=1),
                        jnp.maximum(cm, jnp.max(chunk, axis=1)))
            s, m = lax.fori_loop(1, n_full, body, (s, m), unroll=4)
        if rem:
            tail = x_ref[:, n_full * CK:Ct, :].astype(jnp.float32)
            s = s + jnp.sum(tail, axis=1)
            m = jnp.maximum(m, jnp.max(tail, axis=1))
        return s, m

    # ---- flattened (lane-dense) 7x7 conv + sigmoid ---------------------------
    def _shift(p, off):
        # q[:, i] = p[:, i + off]; zero where i + off falls outside [0, HW).
        if off == 0:
            return p
        if abs(off) >= HW:
            return jnp.zeros_like(p)
        if off > 0:
            return jnp.concatenate(
                [p[:, off:], jnp.zeros((Nb, off), jnp.float32)], axis=1)
        o = -off
        return jnp.concatenate(
            [jnp.zeros((Nb, o), jnp.float32), p[:, :HW - o]], axis=1)

    def _conv_sigmoid_store(w_ref, col_ref, psum, pmax, o_ref):
        col = col_ref[...]                                        # (1, HW) int32

        def masked_hshift(plane, dx):
            o = dx - PAD
            if abs(o) >= W or abs(o) >= HW:
                return jnp.zeros((Nb, HW), jnp.float32)
            s = _shift(plane, o)
            if o > 0:                     # source column = col + o must be < W
                return jnp.where(col < W - o, s, 0.0)
            if o < 0:                     # source column = col + o must be >= 0
                return jnp.where(col >= -o, s, 0.0)
            return s

        # Hoist all 98 SMEM weight scalar reads (avg weights already include 1/C).
        wv = [[[w_ref[ch * K * K + dy * K + dx] for dx in range(K)]
               for dy in range(K)] for ch in range(2)]

        acc = []
        for ch, plane in enumerate((psum, pmax)):
            hs = [masked_hshift(plane, dx) for dx in range(K)]    # 7 hoisted shifts
            a = jnp.zeros((Nb, HW), jnp.float32)
            for dy in range(K):                                   # 7 independent chains
                r = hs[0] * wv[ch][dy][0]
                for dx in range(1, K):
                    r = r + hs[dx] * wv[ch][dy][dx]
                a = a + _shift(r, (dy - PAD) * W)                 # whole-row shift
            acc.append(a)

        z = acc[0] + acc[1]
        res = 1.0 / (1.0 + jnp.exp(-z))                           # sigmoid (EUP exp)
        o_ref[...] = res[:, None, :].astype(o_ref.dtype)          # lane-dense store

    # ---- kernel bodies --------------------------------------------------------
    def kernel_single(w_ref, col_ref, x_ref, o_ref):
        s, m = _reduce_block(x_ref)
        _conv_sigmoid_store(w_ref, col_ref, s, m, o_ref)

    def kernel_multi(w_ref, col_ref, x_ref, o_ref, sum_ref, max_ref):
        c = pl.program_id(1)
        s, m = _reduce_block(x_ref)

        @pl.when(c == 0)
        def _():
            sum_ref[...] = s
            max_ref[...] = m

        @pl.when(c > 0)
        def _():
            sum_ref[...] = sum_ref[...] + s
            max_ref[...] = jnp.maximum(max_ref[...], m)

        @pl.when(c == n_csteps - 1)
        def _():
            _conv_sigmoid_store(w_ref, col_ref, sum_ref[...], max_ref[...], o_ref)

    return kernel_single if n_csteps == 1 else kernel_multi


def spatial_attention(x, weight, *, block_n=None, block_c=None,
                      vmem_limit_bytes=None):
    """sigmoid(conv7x7(concat([mean_c(x), max_c(x)]), pad=3, no bias)).

    x: (N, C, H, W); weight: (1, 2, 7, 7) OIHW.  Returns (N, 1, H, W).
    """
    N, C, H, W = map(int, x.shape)
    HW = H * W
    K = KSIZE
    itemsize = x.dtype.itemsize

    # Fold 1/C into the avg-channel weights so the kernel convolves the raw sum.
    w2 = weight.astype(jnp.float32).reshape(2, K * K)
    w_flat = jnp.concatenate([w2[0] / float(C), w2[1]])           # (98,)

    x_flat = x.reshape(N, C, HW)                                  # lane-dense layout
    col_ids = (jnp.arange(HW, dtype=jnp.int32) % W)[None, :]      # (1, HW)

    phys = _physical_vmem_bytes()
    if vmem_limit_bytes is None:
        vmem_limit_bytes = (phys * 3) // 4
    vmem_limit_bytes = int(min(vmem_limit_bytes, phys))
    plan_cap = (vmem_limit_bytes * 4) // 5                        # compiler headroom

    Nb, Ct, _plan = _plan_blocks(N, C, HW, itemsize, plan_cap,
                                 block_n, block_c, _num_tensorcores())
    grid = (N // Nb, C // Ct)
    n_csteps = grid[1]

    kernel = _make_kernel(Nb, Ct, H, W, n_csteps)
    scratch = ([] if n_csteps == 1 else
               [pltpu.VMEM((Nb, HW), jnp.float32),     # running channel sum
                pltpu.VMEM((Nb, HW), jnp.float32)])    # running channel max

    cost = pl.CostEstimate(
        flops=2 * N * C * HW + 4 * K * K * N * HW,
        transcendentals=N * HW,
        bytes_accessed=N * C * HW * itemsize + N * HW * itemsize + 2 * HW * 4,
    )

    out_flat = pl.pallas_call(
        kernel,
        out_shape=jax.ShapeDtypeStruct((N, 1, HW), x.dtype),
        grid=grid,
        in_specs=[
            pl.BlockSpec(memory_space=pltpu.MemorySpace.SMEM),            # conv weights
            pl.BlockSpec((1, HW), lambda n, c: (0, 0)),                   # column ids
            pl.BlockSpec((Nb, Ct, HW), lambda n, c: (n, c, 0)),           # input tile
        ],
        out_specs=pl.BlockSpec((Nb, 1, HW), lambda n, c: (n, 0, 0)),
        scratch_shapes=scratch,
        compiler_params=pltpu.CompilerParams(
            dimension_semantics=("parallel", "arbitrary"),
            vmem_limit_bytes=vmem_limit_bytes),
        cost_estimate=cost,
    )(w_flat, col_ids, x_flat)

    return out_flat.reshape(N, 1, H, W)


def reference(x, weight):
    avg = jnp.mean(x, axis=1, keepdims=True)
    mx = jnp.max(x, axis=1, keepdims=True)
    xc = jnp.concatenate([avg, mx], axis=1)
    y = lax.conv_general_dilated(
        xc, weight, window_strides=(1, 1),
        padding=[(PAD, PAD), (PAD, PAD)],
        dimension_numbers=("NCHW", "OIHW", "NCHW"))
    return jax.nn.sigmoid(y)


if __name__ == "__main__":
    key = jax.random.PRNGKey(0)
    kx, kw, kx2 = jax.random.split(key, 3)

    # small shapes consistent with the module's forward
    x = jax.random.normal(kx, (2, 4, 16, 16), dtype=jnp.float32)

    # deterministic Conv2d(2, 1, 7, bias=False) weight (Kaiming-ish scale)
    fan_in = 2 * KSIZE * KSIZE
    weight = jax.random.normal(kw, (1, 2, KSIZE, KSIZE), dtype=jnp.float32)
    weight = weight * (1.0 / fan_in) ** 0.5

    out = jax.block_until_ready(spatial_attention(x, weight))
    expected = reference(x, weight)
    assert out.shape == (2, 1, 16, 16)
    assert jnp.allclose(out, expected, atol=1e-5, rtol=1e-5), (
        float(jnp.max(jnp.abs(out - expected))))

    # extra check: exercise the channel-tiled accumulation path (grid c-axis > 1)
    x2 = jax.random.normal(kx2, (2, 16, 16, 16), dtype=jnp.float32)
    out2 = jax.block_until_ready(spatial_attention(x2, weight, block_c=8))
    assert jnp.allclose(out2, reference(x2, weight), atol=1e-5, rtol=1e-5), (
        float(jnp.max(jnp.abs(out2 - reference(x2, weight)))))

    print("KERNEL_OK")
</pallas_src>

<mosaic_0001>
module attributes {stable_mosaic.version = 11 : i64} {
  func.func @kernel_single(%arg0: i32, %arg1: i32, %arg2: memref<98xf32, #tpu.memory_space<smem>>, %arg3: memref<1x256xi32, #tpu.memory_space<vmem>>, %arg4: memref<2x4x256xf32, #tpu.memory_space<vmem>>, %arg5: memref<2x1x256xf32, #tpu.memory_space<vmem>>) attributes {dimension_semantics = [#tpu.dimension_semantics<parallel>, #tpu.dimension_semantics<arbitrary>], iteration_bounds = array<i64: 1, 1>, scalar_prefetch = 0 : i64, scratch_operands = 0 : i64, tpu.core_type = #tpu.core_type<tc>, window_params = [{transform_indices = @transform_0, window_bounds = array<i64: 98>}, {pipeline_mode = #tpu.pipeline_mode<synchronous>, transform_indices = @transform_1, window_bounds = array<i64: 1, 256>}, {transform_indices = @transform_2, window_bounds = array<i64: 2, 4, 256>}, {transform_indices = @transform_3, window_bounds = array<i64: 2, 1, 256>}]} {
    %c0 = arith.constant 0 : index
    %c0_0 = arith.constant 0 : index
    %c0_1 = arith.constant 0 : index
    %0 = vector.load %arg4[%c0, %c0_0, %c0_1] : memref<2x4x256xf32, #tpu.memory_space<vmem>>, vector<2x4x256xf32>
    %cst = arith.constant dense<0.000000e+00> : vector<2x256xf32>
    %1 = vector.multi_reduction <add>, %0, %cst [1] : vector<2x4x256xf32> to vector<2x256xf32>
    %cst_2 = arith.constant dense<0xFF800000> : vector<2x256xf32>
    %2 = vector.multi_reduction <maximumf>, %0, %cst_2 [1] : vector<2x4x256xf32> to vector<2x256xf32>
    %c0_3 = arith.constant 0 : index
    %c0_4 = arith.constant 0 : index
    %3 = vector.load %arg3[%c0_3, %c0_4] : memref<1x256xi32, #tpu.memory_space<vmem>>, vector<1x256xi32>
    %c0_5 = arith.constant 0 : index
    %4 = memref.load %arg2[%c0_5] : memref<98xf32, #tpu.memory_space<smem>>
    %c1 = arith.constant 1 : index
    %5 = memref.load %arg2[%c1] : memref<98xf32, #tpu.memory_space<smem>>
    %c2 = arith.constant 2 : index
    %6 = memref.load %arg2[%c2] : memref<98xf32, #tpu.memory_space<smem>>
    %c3 = arith.constant 3 : index
    %7 = memref.load %arg2[%c3] : memref<98xf32, #tpu.memory_space<smem>>
    %c4 = arith.constant 4 : index
    %8 = memref.load %arg2[%c4] : memref<98xf32, #tpu.memory_space<smem>>
    %c5 = arith.constant 5 : index
    %9 = memref.load %arg2[%c5] : memref<98xf32, #tpu.memory_space<smem>>
    %c6 = arith.constant 6 : index
    %10 = memref.load %arg2[%c6] : memref<98xf32, #tpu.memory_space<smem>>
    %c7 = arith.constant 7 : index
    %11 = memref.load %arg2[%c7] : memref<98xf32, #tpu.memory_space<smem>>
    %c8 = arith.constant 8 : index
    %12 = memref.load %arg2[%c8] : memref<98xf32, #tpu.memory_space<smem>>
    %c9 = arith.constant 9 : index
    %13 = memref.load %arg2[%c9] : memref<98xf32, #tpu.memory_space<smem>>
    %c10 = arith.constant 10 : index
    %14 = memref.load %arg2[%c10] : memref<98xf32, #tpu.memory_space<smem>>
    %c11 = arith.constant 11 : index
    %15 = memref.load %arg2[%c11] : memref<98xf32, #tpu.memory_space<smem>>
    %c12 = arith.constant 12 : index
    %16 = memref.load %arg2[%c12] : memref<98xf32, #tpu.memory_space<smem>>
    %c13 = arith.constant 13 : index
    %17 = memref.load %arg2[%c13] : memref<98xf32, #tpu.memory_space<smem>>
    %c14 = arith.constant 14 : index
    %18 = memref.load %arg2[%c14] : memref<98xf32, #tpu.memory_space<smem>>
    %c15 = arith.constant 15 : index
    %19 = memref.load %arg2[%c15] : memref<98xf32, #tpu.memory_space<smem>>
    %c16 = arith.constant 16 : index
    %20 = memref.load %arg2[%c16] : memref<98xf32, #tpu.memory_space<smem>>
    %c17 = arith.constant 17 : index
    %21 = memref.load %arg2[%c17] : memref<98xf32, #tpu.memory_space<smem>>
    %c18 = arith.constant 18 : index
    %22 = memref.load %arg2[%c18] : memref<98xf32, #tpu.memory_space<smem>>
    %c19 = arith.constant 19 : index
    %23 = memref.load %arg2[%c19] : memref<98xf32, #tpu.memory_space<smem>>
    %c20 = arith.constant 20 : index
    %24 = memref.load %arg2[%c20] : memref<98xf32, #tpu.memory_space<smem>>
    %c21 = arith.constant 21 : index
    %25 = memref.load %arg2[%c21] : memref<98xf32, #tpu.memory_space<smem>>
    %c22 = arith.constant 22 : index
    %26 = memref.load %arg2[%c22] : memref<98xf32, #tpu.memory_space<smem>>
    %c23 = arith.constant 23 : index
    %27 = memref.load %arg2[%c23] : memref<98xf32, #tpu.memory_space<smem>>
    %c24 = arith.constant 24 : index
    %28 = memref.load %arg2[%c24] : memref<98xf32, #tpu.memory_space<smem>>
    %c25 = arith.constant 25 : index
    %29 = memref.load %arg2[%c25] : memref<98xf32, #tpu.memory_space<smem>>
    %c26 = arith.constant 26 : index
    %30 = memref.load %arg2[%c26] : memref<98xf32, #tpu.memory_space<smem>>
    %c27 = arith.constant 27 : index
    %31 = memref.load %arg2[%c27] : memref<98xf32, #tpu.memory_space<smem>>
    %c28 = arith.constant 28 : index
    %32 = memref.load %arg2[%c28] : memref<98xf32, #tpu.memory_space<smem>>
    %c29 = arith.constant 29 : index
    %33 = memref.load %arg2[%c29] : memref<98xf32, #tpu.memory_space<smem>>
    %c30 = arith.constant 30 : index
    %34 = memref.load %arg2[%c30] : memref<98xf32, #tpu.memory_space<smem>>
    %c31 = arith.constant 31 : index
    %35 = memref.load %arg2[%c31] : memref<98xf32, #tpu.memory_space<smem>>
    %c32 = arith.constant 32 : index
    %36 = memref.load %arg2[%c32] : memref<98xf32, #tpu.memory_space<smem>>
    %c33 = arith.constant 33 : index
    %37 = memref.load %arg2[%c33] : memref<98xf32, #tpu.memory_space<smem>>
    %c34 = arith.constant 34 : index
    %38 = memref.load %arg2[%c34] : memref<98xf32, #tpu.memory_space<smem>>
    %c35 = arith.constant 35 : index
    %39 = memref.load %arg2[%c35] : memref<98xf32, #tpu.memory_space<smem>>
    %c36 = arith.constant 36 : index
    %40 = memref.load %arg2[%c36] : memref<98xf32, #tpu.memory_space<smem>>
    %c37 = arith.constant 37 : index
    %41 = memref.load %arg2[%c37] : memref<98xf32, #tpu.memory_space<smem>>
    %c38 = arith.constant 38 : index
    %42 = memref.load %arg2[%c38] : memref<98xf32, #tpu.memory_space<smem>>
    %c39 = arith.constant 39 : index
    %43 = memref.load %arg2[%c39] : memref<98xf32, #tpu.memory_space<smem>>
    %c40 = arith.constant 40 : index
    %44 = memref.load %arg2[%c40] : memref<98xf32, #tpu.memory_space<smem>>
    %c41 = arith.constant 41 : index
    %45 = memref.load %arg2[%c41] : memref<98xf32, #tpu.memory_space<smem>>
    %c42 = arith.constant 42 : index
    %46 = memref.load %arg2[%c42] : memref<98xf32, #tpu.memory_space<smem>>
    %c43 = arith.constant 43 : index
    %47 = memref.load %arg2[%c43] : memref<98xf32, #tpu.memory_space<smem>>
    %c44 = arith.constant 44 : index
    %48 = memref.load %arg2[%c44] : memref<98xf32, #tpu.memory_space<smem>>
    %c45 = arith.constant 45 : index
    %49 = memref.load %arg2[%c45] : memref<98xf32, #tpu.memory_space<smem>>
    %c46 = arith.constant 46 : index
    %50 = memref.load %arg2[%c46] : memref<98xf32, #tpu.memory_space<smem>>
    %c47 = arith.constant 47 : index
    %51 = memref.load %arg2[%c47] : memref<98xf32, #tpu.memory_space<smem>>
    %c48 = arith.constant 48 : index
    %52 = memref.load %arg2[%c48] : memref<98xf32, #tpu.memory_space<smem>>
    %c49 = arith.constant 49 : index
    %53 = memref.load %arg2[%c49] : memref<98xf32, #tpu.memory_space<smem>>
    %c50 = arith.constant 50 : index
    %54 = memref.load %arg2[%c50] : memref<98xf32, #tpu.memory_space<smem>>
    %c51 = arith.constant 51 : index
    %55 = memref.load %arg2[%c51] : memref<98xf32, #tpu.memory_space<smem>>
    %c52 = arith.constant 52 : index
    %56 = memref.load %arg2[%c52] : memref<98xf32, #tpu.memory_space<smem>>
    %c53 = arith.constant 53 : index
    %57 = memref.load %arg2[%c53] : memref<98xf32, #tpu.memory_space<smem>>
    %c54 = arith.constant 54 : index
    %58 = memref.load %arg2[%c54] : memref<98xf32, #tpu.memory_space<smem>>
    %c55 = arith.constant 55 : index
    %59 = memref.load %arg2[%c55] : memref<98xf32, #tpu.memory_space<smem>>
    %c56 = arith.constant 56 : index
    %60 = memref.load %arg2[%c56] : memref<98xf32, #tpu.memory_space<smem>>
    %c57 = arith.constant 57 : index
    %61 = memref.load %arg2[%c57] : memref<98xf32, #tpu.memory_space<smem>>
    %c58 = arith.constant 58 : index
    %62 = memref.load %arg2[%c58] : memref<98xf32, #tpu.memory_space<smem>>
    %c59 = arith.constant 59 : index
    %63 = memref.load %arg2[%c59] : memref<98xf32, #tpu.memory_space<smem>>
    %c60 = arith.constant 60 : index
    %64 = memref.load %arg2[%c60] : memref<98xf32, #tpu.memory_space<smem>>
    %c61 = arith.constant 61 : index
    %65 = memref.load %arg2[%c61] : memref<98xf32, #tpu.memory_space<smem>>
    %c62 = arith.constant 62 : index
    %66 = memref.load %arg2[%c62] : memref<98xf32, #tpu.memory_space<smem>>
    %c63 = arith.constant 63 : index
    %67 = memref.load %arg2[%c63] : memref<98xf32, #tpu.memory_space<smem>>
    %c64 = arith.constant 64 : index
    %68 = memref.load %arg2[%c64] : memref<98xf32, #tpu.memory_space<smem>>
    %c65 = arith.constant 65 : index
    %69 = memref.load %arg2[%c65] : memref<98xf32, #tpu.memory_space<smem>>
    %c66 = arith.constant 66 : index
    %70 = memref.load %arg2[%c66] : memref<98xf32, #tpu.memory_space<smem>>
    %c67 = arith.constant 67 : index
    %71 = memref.load %arg2[%c67] : memref<98xf32, #tpu.memory_space<smem>>
    %c68 = arith.constant 68 : index
    %72 = memref.load %arg2[%c68] : memref<98xf32, #tpu.memory_space<smem>>
    %c69 = arith.constant 69 : index
    %73 = memref.load %arg2[%c69] : memref<98xf32, #tpu.memory_space<smem>>
    %c70 = arith.constant 70 : index
    %74 = memref.load %arg2[%c70] : memref<98xf32, #tpu.memory_space<smem>>
    %c71 = arith.constant 71 : index
    %75 = memref.load %arg2[%c71] : memref<98xf32, #tpu.memory_space<smem>>
    %c72 = arith.constant 72 : index
    %76 = memref.load %arg2[%c72] : memref<98xf32, #tpu.memory_space<smem>>
    %c73 = arith.constant 73 : index
    %77 = memref.load %arg2[%c73] : memref<98xf32, #tpu.memory_space<smem>>
    %c74 = arith.constant 74 : index
    %78 = memref.load %arg2[%c74] : memref<98xf32, #tpu.memory_space<smem>>
    %c75 = arith.constant 75 : index
    %79 = memref.load %arg2[%c75] : memref<98xf32, #tpu.memory_space<smem>>
    %c76 = arith.constant 76 : index
    %80 = memref.load %arg2[%c76] : memref<98xf32, #tpu.memory_space<smem>>
    %c77 = arith.constant 77 : index
    %81 = memref.load %arg2[%c77] : memref<98xf32, #tpu.memory_space<smem>>
    %c78 = arith.constant 78 : index
    %82 = memref.load %arg2[%c78] : memref<98xf32, #tpu.memory_space<smem>>
    %c79 = arith.constant 79 : index
    %83 = memref.load %arg2[%c79] : memref<98xf32, #tpu.memory_space<smem>>
    %c80 = arith.constant 80 : index
    %84 = memref.load %arg2[%c80] : memref<98xf32, #tpu.memory_space<smem>>
    %c81 = arith.constant 81 : index
    %85 = memref.load %arg2[%c81] : memref<98xf32, #tpu.memory_space<smem>>
    %c82 = arith.constant 82 : index
    %86 = memref.load %arg2[%c82] : memref<98xf32, #tpu.memory_space<smem>>
    %c83 = arith.constant 83 : index
    %87 = memref.load %arg2[%c83] : memref<98xf32, #tpu.memory_space<smem>>
    %c84 = arith.constant 84 : index
    %88 = memref.load %arg2[%c84] : memref<98xf32, #tpu.memory_space<smem>>
    %c85 = arith.constant 85 : index
    %89 = memref.load %arg2[%c85] : memref<98xf32, #tpu.memory_space<smem>>
    %c86 = arith.constant 86 : index
    %90 = memref.load %arg2[%c86] : memref<98xf32, #tpu.memory_space<smem>>
    %c87 = arith.constant 87 : index
    %91 = memref.load %arg2[%c87] : memref<98xf32, #tpu.memory_space<smem>>
    %c88 = arith.constant 88 : index
    %92 = memref.load %arg2[%c88] : memref<98xf32, #tpu.memory_space<smem>>
    %c89 = arith.constant 89 : index
    %93 = memref.load %arg2[%c89] : memref<98xf32, #tpu.memory_space<smem>>
    %c90 = arith.constant 90 : index
    %94 = memref.load %arg2[%c90] : memref<98xf32, #tpu.memory_space<smem>>
    %c91 = arith.constant 91 : index
    %95 = memref.load %arg2[%c91] : memref<98xf32, #tpu.memory_space<smem>>
    %c92 = arith.constant 92 : index
    %96 = memref.load %arg2[%c92] : memref<98xf32, #tpu.memory_space<smem>>
    %c93 = arith.constant 93 : index
    %97 = memref.load %arg2[%c93] : memref<98xf32, #tpu.memory_space<smem>>
    %c94 = arith.constant 94 : index
    %98 = memref.load %arg2[%c94] : memref<98xf32, #tpu.memory_space<smem>>
    %c95 = arith.constant 95 : index
    %99 = memref.load %arg2[%c95] : memref<98xf32, #tpu.memory_space<smem>>
    %c96 = arith.constant 96 : index
    %100 = memref.load %arg2[%c96] : memref<98xf32, #tpu.memory_space<smem>>
    %c97 = arith.constant 97 : index
    %101 = memref.load %arg2[%c97] : memref<98xf32, #tpu.memory_space<smem>>
    %cst_6 = arith.constant 0.000000e+00 : f32
    %102 = vector.broadcast %cst_6 : f32 to vector<2x3xf32>
    %103 = vector.extract_strided_slice %1 {offsets = [0, 0], sizes = [2, 253], strides = [1, 1]} : vector<2x256xf32> to vector<2x253xf32>
    %104 = tpu.concatenate %102, %103 in 1 : vector<2x3xf32>, vector<2x253xf32> -> vector<2x256xf32>
    %c3_i32 = arith.constant 3 : i32
    %105 = vector.broadcast %c3_i32 : i32 to vector<1x256xi32>
    %106 = arith.cmpi sge, %3, %105 : vector<1x256xi32>
    %cst_7 = arith.constant 0.000000e+00 : f32
    %107 = vector.shape_cast %106 : vector<1x256xi1> to vector<1x256xi1>
    %108 = vector.broadcast %107 : vector<1x256xi1> to vector<2x256xi1>
    %109 = vector.broadcast %cst_7 : f32 to vector<2x256xf32>
    %110 = arith.select %108, %104, %109 : vector<2x256xi1>, vector<2x256xf32>
    %cst_8 = arith.constant 0.000000e+00 : f32
    %111 = vector.broadcast %cst_8 : f32 to vector<2x2xf32>
    %112 = vector.extract_strided_slice %1 {offsets = [0, 0], sizes = [2, 254], strides = [1, 1]} : vector<2x256xf32> to vector<2x254xf32>
    %113 = tpu.concatenate %111, %112 in 1 : vector<2x2xf32>, vector<2x254xf32> -> vector<2x256xf32>
    %c2_i32 = arith.constant 2 : i32
    %114 = vector.broadcast %c2_i32 : i32 to vector<1x256xi32>
    %115 = arith.cmpi sge, %3, %114 : vector<1x256xi32>
    %cst_9 = arith.constant 0.000000e+00 : f32
    %116 = vector.shape_cast %115 : vector<1x256xi1> to vector<1x256xi1>
    %117 = vector.broadcast %116 : vector<1x256xi1> to vector<2x256xi1>
    %118 = vector.broadcast %cst_9 : f32 to vector<2x256xf32>
    %119 = arith.select %117, %113, %118 : vector<2x256xi1>, vector<2x256xf32>
    %cst_10 = arith.constant 0.000000e+00 : f32
    %120 = vector.broadcast %cst_10 : f32 to vector<2x1xf32>
    %121 = vector.extract_strided_slice %1 {offsets = [0, 0], sizes = [2, 255], strides = [1, 1]} : vector<2x256xf32> to vector<2x255xf32>
    %122 = tpu.concatenate %120, %121 in 1 : vector<2x1xf32>, vector<2x255xf32> -> vector<2x256xf32>
    %c1_i32 = arith.constant 1 : i32
    %123 = vector.broadcast %c1_i32 : i32 to vector<1x256xi32>
    %124 = arith.cmpi sge, %3, %123 : vector<1x256xi32>
    %cst_11 = arith.constant 0.000000e+00 : f32
    %125 = vector.shape_cast %124 : vector<1x256xi1> to vector<1x256xi1>
    %126 = vector.broadcast %125 : vector<1x256xi1> to vector<2x256xi1>
    %127 = vector.broadcast %cst_11 : f32 to vector<2x256xf32>
    %128 = arith.select %126, %122, %127 : vector<2x256xi1>, vector<2x256xf32>
    %129 = vector.extract_strided_slice %1 {offsets = [0, 1], sizes = [2, 255], strides = [1, 1]} : vector<2x256xf32> to vector<2x255xf32>
    %cst_12 = arith.constant 0.000000e+00 : f32
    %130 = vector.broadcast %cst_12 : f32 to vector<2x1xf32>
    %131 = tpu.concatenate %129, %130 in 1 : vector<2x255xf32>, vector<2x1xf32> -> vector<2x256xf32>
    %c15_i32 = arith.constant 15 : i32
    %132 = vector.broadcast %c15_i32 : i32 to vector<1x256xi32>
    %133 = arith.cmpi slt, %3, %132 : vector<1x256xi32>
    %cst_13 = arith.constant 0.000000e+00 : f32
    %134 = vector.shape_cast %133 : vector<1x256xi1> to vector<1x256xi1>
    %135 = vector.broadcast %134 : vector<1x256xi1> to vector<2x256xi1>
    %136 = vector.broadcast %cst_13 : f32 to vector<2x256xf32>
    %137 = arith.select %135, %131, %136 : vector<2x256xi1>, vector<2x256xf32>
    %138 = vector.extract_strided_slice %1 {offsets = [0, 2], sizes = [2, 254], strides = [1, 1]} : vector<2x256xf32> to vector<2x254xf32>
    %cst_14 = arith.constant 0.000000e+00 : f32
    %139 = vector.broadcast %cst_14 : f32 to vector<2x2xf32>
    %140 = tpu.concatenate %138, %139 in 1 : vector<2x254xf32>, vector<2x2xf32> -> vector<2x256xf32>
    %c14_i32 = arith.constant 14 : i32
    %141 = vector.broadcast %c14_i32 : i32 to vector<1x256xi32>
    %142 = arith.cmpi slt, %3, %141 : vector<1x256xi32>
    %cst_15 = arith.constant 0.000000e+00 : f32
    %143 = vector.shape_cast %142 : vector<1x256xi1> to vector<1x256xi1>
    %144 = vector.broadcast %143 : vector<1x256xi1> to vector<2x256xi1>
    %145 = vector.broadcast %cst_15 : f32 to vector<2x256xf32>
    %146 = arith.select %144, %140, %145 : vector<2x256xi1>, vector<2x256xf32>
    %147 = vector.extract_strided_slice %1 {offsets = [0, 3], sizes = [2, 253], strides = [1, 1]} : vector<2x256xf32> to vector<2x253xf32>
    %cst_16 = arith.constant 0.000000e+00 : f32
    %148 = vector.broadcast %cst_16 : f32 to vector<2x3xf32>
    %149 = tpu.concatenate %147, %148 in 1 : vector<2x253xf32>, vector<2x3xf32> -> vector<2x256xf32>
    %c13_i32 = arith.constant 13 : i32
    %150 = vector.broadcast %c13_i32 : i32 to vector<1x256xi32>
    %151 = arith.cmpi slt, %3, %150 : vector<1x256xi32>
    %cst_17 = arith.constant 0.000000e+00 : f32
    %152 = vector.shape_cast %151 : vector<1x256xi1> to vector<1x256xi1>
    %153 = vector.broadcast %152 : vector<1x256xi1> to vector<2x256xi1>
    %154 = vector.broadcast %cst_17 : f32 to vector<2x256xf32>
    %155 = arith.select %153, %149, %154 : vector<2x256xi1>, vector<2x256xf32>
    %cst_18 = arith.constant 0.000000e+00 : f32
    %156 = vector.broadcast %cst_18 : f32 to vector<2x256xf32>
    %157 = vector.broadcast %4 : f32 to vector<2x256xf32>
    %158 = arith.mulf %110, %157 : vector<2x256xf32>
    %159 = vector.broadcast %5 : f32 to vector<2x256xf32>
    %160 = arith.mulf %119, %159 : vector<2x256xf32>
    %161 = arith.addf %158, %160 : vector<2x256xf32>
    %162 = vector.broadcast %6 : f32 to vector<2x256xf32>
    %163 = arith.mulf %128, %162 : vector<2x256xf32>
    %164 = arith.addf %161, %163 : vector<2x256xf32>
    %165 = vector.broadcast %7 : f32 to vector<2x256xf32>
    %166 = arith.mulf %1, %165 : vector<2x256xf32>
    %167 = arith.addf %164, %166 : vector<2x256xf32>
    %168 = vector.broadcast %8 : f32 to vector<2x256xf32>
    %169 = arith.mulf %137, %168 : vector<2x256xf32>
    %170 = arith.addf %167, %169 : vector<2x256xf32>
    %171 = vector.broadcast %9 : f32 to vector<2x256xf32>
    %172 = arith.mulf %146, %171 : vector<2x256xf32>
    %173 = arith.addf %170, %172 : vector<2x256xf32>
    %174 = vector.broadcast %10 : f32 to vector<2x256xf32>
    %175 = arith.mulf %155, %174 : vector<2x256xf32>
    %176 = arith.addf %173, %175 : vector<2x256xf32>
    %cst_19 = arith.constant 0.000000e+00 : f32
    %177 = vector.broadcast %cst_19 : f32 to vector<2x48xf32>
    %178 = vector.extract_strided_slice %176 {offsets = [0, 0], sizes = [2, 208], strides = [1, 1]} : vector<2x256xf32> to vector<2x208xf32>
    %179 = tpu.concatenate %177, %178 in 1 : vector<2x48xf32>, vector<2x208xf32> -> vector<2x256xf32>
    %180 = arith.addf %156, %179 : vector<2x256xf32>
    %181 = vector.broadcast %11 : f32 to vector<2x256xf32>
    %182 = arith.mulf %110, %181 : vector<2x256xf32>
    %183 = vector.broadcast %12 : f32 to vector<2x256xf32>
    %184 = arith.mulf %119, %183 : vector<2x256xf32>
    %185 = arith.addf %182, %184 : vector<2x256xf32>
    %186 = vector.broadcast %13 : f32 to vector<2x256xf32>
    %187 = arith.mulf %128, %186 : vector<2x256xf32>
    %188 = arith.addf %185, %187 : vector<2x256xf32>
    %189 = vector.broadcast %14 : f32 to vector<2x256xf32>
    %190 = arith.mulf %1, %189 : vector<2x256xf32>
    %191 = arith.addf %188, %190 : vector<2x256xf32>
    %192 = vector.broadcast %15 : f32 to vector<2x256xf32>
    %193 = arith.mulf %137, %192 : vector<2x256xf32>
    %194 = arith.addf %191, %193 : vector<2x256xf32>
    %195 = vector.broadcast %16 : f32 to vector<2x256xf32>
    %196 = arith.mulf %146, %195 : vector<2x256xf32>
    %197 = arith.addf %194, %196 : vector<2x256xf32>
    %198 = vector.broadcast %17 : f32 to vector<2x256xf32>
    %199 = arith.mulf %155, %198 : vector<2x256xf32>
    %200 = arith.addf %197, %199 : vector<2x256xf32>
    %cst_20 = arith.constant 0.000000e+00 : f32
    %201 = vector.broadcast %cst_20 : f32 to vector<2x32xf32>
    %202 = vector.extract_strided_slice %200 {offsets = [0, 0], sizes = [2, 224], strides = [1, 1]} : vector<2x256xf32> to vector<2x224xf32>
    %203 = tpu.concatenate %201, %202 in 1 : vector<2x32xf32>, vector<2x224xf32> -> vector<2x256xf32>
    %204 = arith.addf %180, %203 : vector<2x256xf32>
    %205 = vector.broadcast %18 : f32 to vector<2x256xf32>
    %206 = arith.mulf %110, %205 : vector<2x256xf32>
    %207 = vector.broadcast %19 : f32 to vector<2x256xf32>
    %208 = arith.mulf %119, %207 : vector<2x256xf32>
    %209 = arith.addf %206, %208 : vector<2x256xf32>
    %210 = vector.broadcast %20 : f32 to vector<2x256xf32>
    %211 = arith.mulf %128, %210 : vector<2x256xf32>
    %212 = arith.addf %209, %211 : vector<2x256xf32>
    %213 = vector.broadcast %21 : f32 to vector<2x256xf32>
    %214 = arith.mulf %1, %213 : vector<2x256xf32>
    %215 = arith.addf %212, %214 : vector<2x256xf32>
    %216 = vector.broadcast %22 : f32 to vector<2x256xf32>
    %217 = arith.mulf %137, %216 : vector<2x256xf32>
    %218 = arith.addf %215, %217 : vector<2x256xf32>
    %219 = vector.broadcast %23 : f32 to vector<2x256xf32>
    %220 = arith.mulf %146, %219 : vector<2x256xf32>
    %221 = arith.addf %218, %220 : vector<2x256xf32>
    %222 = vector.broadcast %24 : f32 to vector<2x256xf32>
    %223 = arith.mulf %155, %222 : vector<2x256xf32>
    %224 = arith.addf %221, %223 : vector<2x256xf32>
    %cst_21 = arith.constant 0.000000e+00 : f32
    %225 = vector.broadcast %cst_21 : f32 to vector<2x16xf32>
    %226 = vector.extract_strided_slice %224 {offsets = [0, 0], sizes = [2, 240], strides = [1, 1]} : vector<2x256xf32> to vector<2x240xf32>
    %227 = tpu.concatenate %225, %226 in 1 : vector<2x16xf32>, vector<2x240xf32> -> vector<2x256xf32>
    %228 = arith.addf %204, %227 : vector<2x256xf32>
    %229 = vector.broadcast %25 : f32 to vector<2x256xf32>
    %230 = arith.mulf %110, %229 : vector<2x256xf32>
    %231 = vector.broadcast %26 : f32 to vector<2x256xf32>
    %232 = arith.mulf %119, %231 : vector<2x256xf32>
    %233 = arith.addf %230, %232 : vector<2x256xf32>
    %234 = vector.broadcast %27 : f32 to vector<2x256xf32>
    %235 = arith.mulf %128, %234 : vector<2x256xf32>
    %236 = arith.addf %233, %235 : vector<2x256xf32>
    %237 = vector.broadcast %28 : f32 to vector<2x256xf32>
    %238 = arith.mulf %1, %237 : vector<2x256xf32>
    %239 = arith.addf %236, %238 : vector<2x256xf32>
    %240 = vector.broadcast %29 : f32 to vector<2x256xf32>
    %241 = arith.mulf %137, %240 : vector<2x256xf32>
    %242 = arith.addf %239, %241 : vector<2x256xf32>
    %243 = vector.broadcast %30 : f32 to vector<2x256xf32>
    %244 = arith.mulf %146, %243 : vector<2x256xf32>
    %245 = arith.addf %242, %244 : vector<2x256xf32>
    %246 = vector.broadcast %31 : f32 to vector<2x256xf32>
    %247 = arith.mulf %155, %246 : vector<2x256xf32>
    %248 = arith.addf %245, %247 : vector<2x256xf32>
    %249 = arith.addf %228, %248 : vector<2x256xf32>
    %250 = vector.broadcast %32 : f32 to vector<2x256xf32>
    %251 = arith.mulf %110, %250 : vector<2x256xf32>
    %252 = vector.broadcast %33 : f32 to vector<2x256xf32>
    %253 = arith.mulf %119, %252 : vector<2x256xf32>
    %254 = arith.addf %251, %253 : vector<2x256xf32>
    %255 = vector.broadcast %34 : f32 to vector<2x256xf32>
    %256 = arith.mulf %128, %255 : vector<2x256xf32>
    %257 = arith.addf %254, %256 : vector<2x256xf32>
    %258 = vector.broadcast %35 : f32 to vector<2x256xf32>
    %259 = arith.mulf %1, %258 : vector<2x256xf32>
    %260 = arith.addf %257, %259 : vector<2x256xf32>
    %261 = vector.broadcast %36 : f32 to vector<2x256xf32>
    %262 = arith.mulf %137, %261 : vector<2x256xf32>
    %263 = arith.addf %260, %262 : vector<2x256xf32>
    %264 = vector.broadcast %37 : f32 to vector<2x256xf32>
    %265 = arith.mulf %146, %264 : vector<2x256xf32>
    %266 = arith.addf %263, %265 : vector<2x256xf32>
    %267 = vector.broadcast %38 : f32 to vector<2x256xf32>
    %268 = arith.mulf %155, %267 : vector<2x256xf32>
    %269 = arith.addf %266, %268 : vector<2x256xf32>
    %270 = vector.extract_strided_slice %269 {offsets = [0, 16], sizes = [2, 240], strides = [1, 1]} : vector<2x256xf32> to vector<2x240xf32>
    %cst_22 = arith.constant 0.000000e+00 : f32
    %271 = vector.broadcast %cst_22 : f32 to vector<2x16xf32>
    %272 = tpu.concatenate %270, %271 in 1 : vector<2x240xf32>, vector<2x16xf32> -> vector<2x256xf32>
    %273 = arith.addf %249, %272 : vector<2x256xf32>
    %274 = vector.broadcast %39 : f32 to vector<2x256xf32>
    %275 = arith.mulf %110, %274 : vector<2x256xf32>
    %276 = vector.broadcast %40 : f32 to vector<2x256xf32>
    %277 = arith.mulf %119, %276 : vector<2x256xf32>
    %278 = arith.addf %275, %277 : vector<2x256xf32>
    %279 = vector.broadcast %41 : f32 to vector<2x256xf32>
    %280 = arith.mulf %128, %279 : vector<2x256xf32>
    %281 = arith.addf %278, %280 : vector<2x256xf32>
    %282 = vector.broadcast %42 : f32 to vector<2x256xf32>
    %283 = arith.mulf %1, %282 : vector<2x256xf32>
    %284 = arith.addf %281, %283 : vector<2x256xf32>
    %285 = vector.broadcast %43 : f32 to vector<2x256xf32>
    %286 = arith.mulf %137, %285 : vector<2x256xf32>
    %287 = arith.addf %284, %286 : vector<2x256xf32>
    %288 = vector.broadcast %44 : f32 to vector<2x256xf32>
    %289 = arith.mulf %146, %288 : vector<2x256xf32>
    %290 = arith.addf %287, %289 : vector<2x256xf32>
    %291 = vector.broadcast %45 : f32 to vector<2x256xf32>
    %292 = arith.mulf %155, %291 : vector<2x256xf32>
    %293 = arith.addf %290, %292 : vector<2x256xf32>
    %294 = vector.extract_strided_slice %293 {offsets = [0, 32], sizes = [2, 224], strides = [1, 1]} : vector<2x256xf32> to vector<2x224xf32>
    %cst_23 = arith.constant 0.000000e+00 : f32
    %295 = vector.broadcast %cst_23 : f32 to vector<2x32xf32>
    %296 = tpu.concatenate %294, %295 in 1 : vector<2x224xf32>, vector<2x32xf32> -> vector<2x256xf32>
    %297 = arith.addf %273, %296 : vector<2x256xf32>
    %298 = vector.broadcast %46 : f32 to vector<2x256xf32>
    %299 = arith.mulf %110, %298 : vector<2x256xf32>
    %300 = vector.broadcast %47 : f32 to vector<2x256xf32>
    %301 = arith.mulf %119, %300 : vector<2x256xf32>
    %302 = arith.addf %299, %301 : vector<2x256xf32>
    %303 = vector.broadcast %48 : f32 to vector<2x256xf32>
    %304 = arith.mulf %128, %303 : vector<2x256xf32>
    %305 = arith.addf %302, %304 : vector<2x256xf32>
    %306 = vector.broadcast %49 : f32 to vector<2x256xf32>
    %307 = arith.mulf %1, %306 : vector<2x256xf32>
    %308 = arith.addf %305, %307 : vector<2x256xf32>
    %309 = vector.broadcast %50 : f32 to vector<2x256xf32>
    %310 = arith.mulf %137, %309 : vector<2x256xf32>
    %311 = arith.addf %308, %310 : vector<2x256xf32>
    %312 = vector.broadcast %51 : f32 to vector<2x256xf32>
    %313 = arith.mulf %146, %312 : vector<2x256xf32>
    %314 = arith.addf %311, %313 : vector<2x256xf32>
    %315 = vector.broadcast %52 : f32 to vector<2x256xf32>
    %316 = arith.mulf %155, %315 : vector<2x256xf32>
    %317 = arith.addf %314, %316 : vector<2x256xf32>
    %318 = vector.extract_strided_slice %317 {offsets = [0, 48], sizes = [2, 208], strides = [1, 1]} : vector<2x256xf32> to vector<2x208xf32>
    %cst_24 = arith.constant 0.000000e+00 : f32
    %319 = vector.broadcast %cst_24 : f32 to vector<2x48xf32>
    %320 = tpu.concatenate %318, %319 in 1 : vector<2x208xf32>, vector<2x48xf32> -> vector<2x256xf32>
    %321 = arith.addf %297, %320 : vector<2x256xf32>
    %cst_25 = arith.constant 0.000000e+00 : f32
    %322 = vector.broadcast %cst_25 : f32 to vector<2x3xf32>
    %323 = vector.extract_strided_slice %2 {offsets = [0, 0], sizes = [2, 253], strides = [1, 1]} : vector<2x256xf32> to vector<2x253xf32>
    %324 = tpu.concatenate %322, %323 in 1 : vector<2x3xf32>, vector<2x253xf32> -> vector<2x256xf32>
    %c3_i32_26 = arith.constant 3 : i32
    %325 = vector.broadcast %c3_i32_26 : i32 to vector<1x256xi32>
    %326 = arith.cmpi sge, %3, %325 : vector<1x256xi32>
    %cst_27 = arith.constant 0.000000e+00 : f32
    %327 = vector.shape_cast %326 : vector<1x256xi1> to vector<1x256xi1>
    %328 = vector.broadcast %327 : vector<1x256xi1> to vector<2x256xi1>
    %329 = vector.broadcast %cst_27 : f32 to vector<2x256xf32>
    %330 = arith.select %328, %324, %329 : vector<2x256xi1>, vector<2x256xf32>
    %cst_28 = arith.constant 0.000000e+00 : f32
    %331 = vector.broadcast %cst_28 : f32 to vector<2x2xf32>
    %332 = vector.extract_strided_slice %2 {offsets = [0, 0], sizes = [2, 254], strides = [1, 1]} : vector<2x256xf32> to vector<2x254xf32>
    %333 = tpu.concatenate %331, %332 in 1 : vector<2x2xf32>, vector<2x254xf32> -> vector<2x256xf32>
    %c2_i32_29 = arith.constant 2 : i32
    %334 = vector.broadcast %c2_i32_29 : i32 to vector<1x256xi32>
    %335 = arith.cmpi sge, %3, %334 : vector<1x256xi32>
    %cst_30 = arith.constant 0.000000e+00 : f32
    %336 = vector.shape_cast %335 : vector<1x256xi1> to vector<1x256xi1>
    %337 = vector.broadcast %336 : vector<1x256xi1> to vector<2x256xi1>
    %338 = vector.broadcast %cst_30 : f32 to vector<2x256xf32>
    %339 = arith.select %337, %333, %338 : vector<2x256xi1>, vector<2x256xf32>
    %cst_31 = arith.constant 0.000000e+00 : f32
    %340 = vector.broadcast %cst_31 : f32 to vector<2x1xf32>
    %341 = vector.extract_strided_slice %2 {offsets = [0, 0], sizes = [2, 255], strides = [1, 1]} : vector<2x256xf32> to vector<2x255xf32>
    %342 = tpu.concatenate %340, %341 in 1 : vector<2x1xf32>, vector<2x255xf32> -> vector<2x256xf32>
    %c1_i32_32 = arith.constant 1 : i32
    %343 = vector.broadcast %c1_i32_32 : i32 to vector<1x256xi32>
    %344 = arith.cmpi sge, %3, %343 : vector<1x256xi32>
    %cst_33 = arith.constant 0.000000e+00 : f32
    %345 = vector.shape_cast %344 : vector<1x256xi1> to vector<1x256xi1>
    %346 = vector.broadcast %345 : vector<1x256xi1> to vector<2x256xi1>
    %347 = vector.broadcast %cst_33 : f32 to vector<2x256xf32>
    %348 = arith.select %346, %342, %347 : vector<2x256xi1>, vector<2x256xf32>
    %349 = vector.extract_strided_slice %2 {offsets = [0, 1], sizes = [2, 255], strides = [1, 1]} : vector<2x256xf32> to vector<2x255xf32>
    %cst_34 = arith.constant 0.000000e+00 : f32
    %350 = vector.broadcast %cst_34 : f32 to vector<2x1xf32>
    %351 = tpu.concatenate %349, %350 in 1 : vector<2x255xf32>, vector<2x1xf32> -> vector<2x256xf32>
    %c15_i32_35 = arith.constant 15 : i32
    %352 = vector.broadcast %c15_i32_35 : i32 to vector<1x256xi32>
    %353 = arith.cmpi slt, %3, %352 : vector<1x256xi32>
    %cst_36 = arith.constant 0.000000e+00 : f32
    %354 = vector.shape_cast %353 : vector<1x256xi1> to vector<1x256xi1>
    %355 = vector.broadcast %354 : vector<1x256xi1> to vector<2x256xi1>
    %356 = vector.broadcast %cst_36 : f32 to vector<2x256xf32>
    %357 = arith.select %355, %351, %356 : vector<2x256xi1>, vector<2x256xf32>
    %358 = vector.extract_strided_slice %2 {offsets = [0, 2], sizes = [2, 254], strides = [1, 1]} : vector<2x256xf32> to vector<2x254xf32>
    %cst_37 = arith.constant 0.000000e+00 : f32
    %359 = vector.broadcast %cst_37 : f32 to vector<2x2xf32>
    %360 = tpu.concatenate %358, %359 in 1 : vector<2x254xf32>, vector<2x2xf32> -> vector<2x256xf32>
    %c14_i32_38 = arith.constant 14 : i32
    %361 = vector.broadcast %c14_i32_38 : i32 to vector<1x256xi32>
    %362 = arith.cmpi slt, %3, %361 : vector<1x256xi32>
    %cst_39 = arith.constant 0.000000e+00 : f32
    %363 = vector.shape_cast %362 : vector<1x256xi1> to vector<1x256xi1>
    %364 = vector.broadcast %363 : vector<1x256xi1> to vector<2x256xi1>
    %365 = vector.broadcast %cst_39 : f32 to vector<2x256xf32>
    %366 = arith.select %364, %360, %365 : vector<2x256xi1>, vector<2x256xf32>
    %367 = vector.extract_strided_slice %2 {offsets = [0, 3], sizes = [2, 253], strides = [1, 1]} : vector<2x256xf32> to vector<2x253xf32>
    %cst_40 = arith.constant 0.000000e+00 : f32
    %368 = vector.broadcast %cst_40 : f32 to vector<2x3xf32>
    %369 = tpu.concatenate %367, %368 in 1 : vector<2x253xf32>, vector<2x3xf32> -> vector<2x256xf32>
    %c13_i32_41 = arith.constant 13 : i32
    %370 = vector.broadcast %c13_i32_41 : i32 to vector<1x256xi32>
    %371 = arith.cmpi slt, %3, %370 : vector<1x256xi32>
    %cst_42 = arith.constant 0.000000e+00 : f32
    %372 = vector.shape_cast %371 : vector<1x256xi1> to vector<1x256xi1>
    %373 = vector.broadcast %372 : vector<1x256xi1> to vector<2x256xi1>
    %374 = vector.broadcast %cst_42 : f32 to vector<2x256xf32>
    %375 = arith.select %373, %369, %374 : vector<2x256xi1>, vector<2x256xf32>
    %cst_43 = arith.constant 0.000000e+00 : f32
    %376 = vector.broadcast %cst_43 : f32 to vector<2x256xf32>
    %377 = vector.broadcast %53 : f32 to vector<2x256xf32>
    %378 = arith.mulf %330, %377 : vector<2x256xf32>
    %379 = vector.broadcast %54 : f32 to vector<2x256xf32>
    %380 = arith.mulf %339, %379 : vector<2x256xf32>
    %381 = arith.addf %378, %380 : vector<2x256xf32>
    %382 = vector.broadcast %55 : f32 to vector<2x256xf32>
    %383 = arith.mulf %348, %382 : vector<2x256xf32>
    %384 = arith.addf %381, %383 : vector<2x256xf32>
    %385 = vector.broadcast %56 : f32 to vector<2x256xf32>
    %386 = arith.mulf %2, %385 : vector<2x256xf32>
    %387 = arith.addf %384, %386 : vector<2x256xf32>
    %388 = vector.broadcast %57 : f32 to vector<2x256xf32>
    %389 = arith.mulf %357, %388 : vector<2x256xf32>
    %390 = arith.addf %387, %389 : vector<2x256xf32>
    %391 = vector.broadcast %58 : f32 to vector<2x256xf32>
    %392 = arith.mulf %366, %391 : vector<2x256xf32>
    %393 = arith.addf %390, %392 : vector<2x256xf32>
    %394 = vector.broadcast %59 : f32 to vector<2x256xf32>
    %395 = arith.mulf %375, %394 : vector<2x256xf32>
    %396 = arith.addf %393, %395 : vector<2x256xf32>
    %cst_44 = arith.constant 0.000000e+00 : f32
    %397 = vector.broadcast %cst_44 : f32 to vector<2x48xf32>
    %398 = vector.extract_strided_slice %396 {offsets = [0, 0], sizes = [2, 208], strides = [1, 1]} : vector<2x256xf32> to vector<2x208xf32>
    %399 = tpu.concatenate %397, %398 in 1 : vector<2x48xf32>, vector<2x208xf32> -> vector<2x256xf32>
    %400 = arith.addf %376, %399 : vector<2x256xf32>
    %401 = vector.broadcast %60 : f32 to vector<2x256xf32>
    %402 = arith.mulf %330, %401 : vector<2x256xf32>
    %403 = vector.broadcast %61 : f32 to vector<2x256xf32>
    %404 = arith.mulf %339, %403 : vector<2x256xf32>
    %405 = arith.addf %402, %404 : vector<2x256xf32>
    %406 = vector.broadcast %62 : f32 to vector<2x256xf32>
    %407 = arith.mulf %348, %406 : vector<2x256xf32>
    %408 = arith.addf %405, %407 : vector<2x256xf32>
    %409 = vector.broadcast %63 : f32 to vector<2x256xf32>
    %410 = arith.mulf %2, %409 : vector<2x256xf32>
    %411 = arith.addf %408, %410 : vector<2x256xf32>
    %412 = vector.broadcast %64 : f32 to vector<2x256xf32>
    %413 = arith.mulf %357, %412 : vector<2x256xf32>
    %414 = arith.addf %411, %413 : vector<2x256xf32>
    %415 = vector.broadcast %65 : f32 to vector<2x256xf32>
    %416 = arith.mulf %366, %415 : vector<2x256xf32>
    %417 = arith.addf %414, %416 : vector<2x256xf32>
    %418 = vector.broadcast %66 : f32 to vector<2x256xf32>
    %419 = arith.mulf %375, %418 : vector<2x256xf32>
    %420 = arith.addf %417, %419 : vector<2x256xf32>
    %cst_45 = arith.constant 0.000000e+00 : f32
    %421 = vector.broadcast %cst_45 : f32 to vector<2x32xf32>
    %422 = vector.extract_strided_slice %420 {offsets = [0, 0], sizes = [2, 224], strides = [1, 1]} : vector<2x256xf32> to vector<2x224xf32>
    %423 = tpu.concatenate %421, %422 in 1 : vector<2x32xf32>, vector<2x224xf32> -> vector<2x256xf32>
    %424 = arith.addf %400, %423 : vector<2x256xf32>
    %425 = vector.broadcast %67 : f32 to vector<2x256xf32>
    %426 = arith.mulf %330, %425 : vector<2x256xf32>
    %427 = vector.broadcast %68 : f32 to vector<2x256xf32>
    %428 = arith.mulf %339, %427 : vector<2x256xf32>
    %429 = arith.addf %426, %428 : vector<2x256xf32>
    %430 = vector.broadcast %69 : f32 to vector<2x256xf32>
    %431 = arith.mulf %348, %430 : vector<2x256xf32>
    %432 = arith.addf %429, %431 : vector<2x256xf32>
    %433 = vector.broadcast %70 : f32 to vector<2x256xf32>
    %434 = arith.mulf %2, %433 : vector<2x256xf32>
    %435 = arith.addf %432, %434 : vector<2x256xf32>
    %436 = vector.broadcast %71 : f32 to vector<2x256xf32>
    %437 = arith.mulf %357, %436 : vector<2x256xf32>
    %438 = arith.addf %435, %437 : vector<2x256xf32>
    %439 = vector.broadcast %72 : f32 to vector<2x256xf32>
    %440 = arith.mulf %366, %439 : vector<2x256xf32>
    %441 = arith.addf %438, %440 : vector<2x256xf32>
    %442 = vector.broadcast %73 : f32 to vector<2x256xf32>
    %443 = arith.mulf %375, %442 : vector<2x256xf32>
    %444 = arith.addf %441, %443 : vector<2x256xf32>
    %cst_46 = arith.constant 0.000000e+00 : f32
    %445 = vector.broadcast %cst_46 : f32 to vector<2x16xf32>
    %446 = vector.extract_strided_slice %444 {offsets = [0, 0], sizes = [2, 240], strides = [1, 1]} : vector<2x256xf32> to vector<2x240xf32>
    %447 = tpu.concatenate %445, %446 in 1 : vector<2x16xf32>, vector<2x240xf32> -> vector<2x256xf32>
    %448 = arith.addf %424, %447 : vector<2x256xf32>
    %449 = vector.broadcast %74 : f32 to vector<2x256xf32>
    %450 = arith.mulf %330, %449 : vector<2x256xf32>
    %451 = vector.broadcast %75 : f32 to vector<2x256xf32>
    %452 = arith.mulf %339, %451 : vector<2x256xf32>
    %453 = arith.addf %450, %452 : vector<2x256xf32>
    %454 = vector.broadcast %76 : f32 to vector<2x256xf32>
    %455 = arith.mulf %348, %454 : vector<2x256xf32>
    %456 = arith.addf %453, %455 : vector<2x256xf32>
    %457 = vector.broadcast %77 : f32 to vector<2x256xf32>
    %458 = arith.mulf %2, %457 : vector<2x256xf32>
    %459 = arith.addf %456, %458 : vector<2x256xf32>
    %460 = vector.broadcast %78 : f32 to vector<2x256xf32>
    %461 = arith.mulf %357, %460 : vector<2x256xf32>
    %462 = arith.addf %459, %461 : vector<2x256xf32>
    %463 = vector.broadcast %79 : f32 to vector<2x256xf32>
    %464 = arith.mulf %366, %463 : vector<2x256xf32>
    %465 = arith.addf %462, %464 : vector<2x256xf32>
    %466 = vector.broadcast %80 : f32 to vector<2x256xf32>
    %467 = arith.mulf %375, %466 : vector<2x256xf32>
    %468 = arith.addf %465, %467 : vector<2x256xf32>
    %469 = arith.addf %448, %468 : vector<2x256xf32>
    %470 = vector.broadcast %81 : f32 to vector<2x256xf32>
    %471 = arith.mulf %330, %470 : vector<2x256xf32>
    %472 = vector.broadcast %82 : f32 to vector<2x256xf32>
    %473 = arith.mulf %339, %472 : vector<2x256xf32>
    %474 = arith.addf %471, %473 : vector<2x256xf32>
    %475 = vector.broadcast %83 : f32 to vector<2x256xf32>
    %476 = arith.mulf %348, %475 : vector<2x256xf32>
    %477 = arith.addf %474, %476 : vector<2x256xf32>
    %478 = vector.broadcast %84 : f32 to vector<2x256xf32>
    %479 = arith.mulf %2, %478 : vector<2x256xf32>
    %480 = arith.addf %477, %479 : vector<2x256xf32>
    %481 = vector.broadcast %85 : f32 to vector<2x256xf32>
    %482 = arith.mulf %357, %481 : vector<2x256xf32>
    %483 = arith.addf %480, %482 : vector<2x256xf32>
    %484 = vector.broadcast %86 : f32 to vector<2x256xf32>
    %485 = arith.mulf %366, %484 : vector<2x256xf32>
    %486 = arith.addf %483, %485 : vector<2x256xf32>
    %487 = vector.broadcast %87 : f32 to vector<2x256xf32>
    %488 = arith.mulf %375, %487 : vector<2x256xf32>
    %489 = arith.addf %486, %488 : vector<2x256xf32>
    %490 = vector.extract_strided_slice %489 {offsets = [0, 16], sizes = [2, 240], strides = [1, 1]} : vector<2x256xf32> to vector<2x240xf32>
    %cst_47 = arith.constant 0.000000e+00 : f32
    %491 = vector.broadcast %cst_47 : f32 to vector<2x16xf32>
    %492 = tpu.concatenate %490, %491 in 1 : vector<2x240xf32>, vector<2x16xf32> -> vector<2x256xf32>
    %493 = arith.addf %469, %492 : vector<2x256xf32>
    %494 = vector.broadcast %88 : f32 to vector<2x256xf32>
    %495 = arith.mulf %330, %494 : vector<2x256xf32>
    %496 = vector.broadcast %89 : f32 to vector<2x256xf32>
    %497 = arith.mulf %339, %496 : vector<2x256xf32>
    %498 = arith.addf %495, %497 : vector<2x256xf32>
    %499 = vector.broadcast %90 : f32 to vector<2x256xf32>
    %500 = arith.mulf %348, %499 : vector<2x256xf32>
    %501 = arith.addf %498, %500 : vector<2x256xf32>
    %502 = vector.broadcast %91 : f32 to vector<2x256xf32>
    %503 = arith.mulf %2, %502 : vector<2x256xf32>
    %504 = arith.addf %501, %503 : vector<2x256xf32>
    %505 = vector.broadcast %92 : f32 to vector<2x256xf32>
    %506 = arith.mulf %357, %505 : vector<2x256xf32>
    %507 = arith.addf %504, %506 : vector<2x256xf32>
    %508 = vector.broadcast %93 : f32 to vector<2x256xf32>
    %509 = arith.mulf %366, %508 : vector<2x256xf32>
    %510 = arith.addf %507, %509 : vector<2x256xf32>
    %511 = vector.broadcast %94 : f32 to vector<2x256xf32>
    %512 = arith.mulf %375, %511 : vector<2x256xf32>
    %513 = arith.addf %510, %512 : vector<2x256xf32>
    %514 = vector.extract_strided_slice %513 {offsets = [0, 32], sizes = [2, 224], strides = [1, 1]} : vector<2x256xf32> to vector<2x224xf32>
    %cst_48 = arith.constant 0.000000e+00 : f32
    %515 = vector.broadcast %cst_48 : f32 to vector<2x32xf32>
    %516 = tpu.concatenate %514, %515 in 1 : vector<2x224xf32>, vector<2x32xf32> -> vector<2x256xf32>
    %517 = arith.addf %493, %516 : vector<2x256xf32>
    %518 = vector.broadcast %95 : f32 to vector<2x256xf32>
    %519 = arith.mulf %330, %518 : vector<2x256xf32>
    %520 = vector.broadcast %96 : f32 to vector<2x256xf32>
    %521 = arith.mulf %339, %520 : vector<2x256xf32>
    %522 = arith.addf %519, %521 : vector<2x256xf32>
    %523 = vector.broadcast %97 : f32 to vector<2x256xf32>
    %524 = arith.mulf %348, %523 : vector<2x256xf32>
    %525 = arith.addf %522, %524 : vector<2x256xf32>
    %526 = vector.broadcast %98 : f32 to vector<2x256xf32>
    %527 = arith.mulf %2, %526 : vector<2x256xf32>
    %528 = arith.addf %525, %527 : vector<2x256xf32>
    %529 = vector.broadcast %99 : f32 to vector<2x256xf32>
    %530 = arith.mulf %357, %529 : vector<2x256xf32>
    %531 = arith.addf %528, %530 : vector<2x256xf32>
    %532 = vector.broadcast %100 : f32 to vector<2x256xf32>
    %533 = arith.mulf %366, %532 : vector<2x256xf32>
    %534 = arith.addf %531, %533 : vector<2x256xf32>
    %535 = vector.broadcast %101 : f32 to vector<2x256xf32>
    %536 = arith.mulf %375, %535 : vector<2x256xf32>
    %537 = arith.addf %534, %536 : vector<2x256xf32>
    %538 = vector.extract_strided_slice %537 {offsets = [0, 48], sizes = [2, 208], strides = [1, 1]} : vector<2x256xf32> to vector<2x208xf32>
    %cst_49 = arith.constant 0.000000e+00 : f32
    %539 = vector.broadcast %cst_49 : f32 to vector<2x48xf32>
    %540 = tpu.concatenate %538, %539 in 1 : vector<2x208xf32>, vector<2x48xf32> -> vector<2x256xf32>
    %541 = arith.addf %517, %540 : vector<2x256xf32>
    %542 = arith.addf %321, %541 : vector<2x256xf32>
    %cst_50 = arith.constant 0.000000e+00 : f32
    %543 = vector.broadcast %cst_50 : f32 to vector<2x256xf32>
    %544 = arith.subf %543, %542 : vector<2x256xf32>
    %545 = math.exp %544 : vector<2x256xf32>
    %cst_51 = arith.constant 1.000000e+00 : f32
    %546 = vector.broadcast %cst_51 : f32 to vector<2x256xf32>
    %547 = arith.addf %546, %545 : vector<2x256xf32>
    %cst_52 = arith.constant 1.000000e+00 : f32
    %548 = vector.broadcast %cst_52 : f32 to vector<2x256xf32>
    %549 = arith.divf %548, %547 : vector<2x256xf32>
    %550 = vector.shape_cast %549 : vector<2x256xf32> to vector<2x1x256xf32>
    %c0_53 = arith.constant 0 : index
    %c0_54 = arith.constant 0 : index
    %c0_55 = arith.constant 0 : index
    %551 = vector.load %arg5[%c0_53, %c0_54, %c0_55] : memref<2x1x256xf32, #tpu.memory_space<vmem>>, vector<2x1x256xf32>
    tpu.vector_store %arg5[%c0_53, %c0_54, %c0_55], %550 {strides = array<i32>} : memref<2x1x256xf32, #tpu.memory_space<vmem>>, vector<2x1x256xf32>,
    return
  }
  func.func @transform_0(%arg0: i32, %arg1: i32) -> i32 {
    %c0_i32 = arith.constant 0 : i32
    %c0_i32_0 = arith.constant 0 : i32
    return %c0_i32 : i32
  }
  func.func @transform_1(%arg0: i32, %arg1: i32) -> (i32, i32) {
    %c0_i32 = arith.constant 0 : i32
    %c0_i32_0 = arith.constant 0 : i32
    %c0_i32_1 = arith.constant 0 : i32
    return %c0_i32, %c0_i32_0 : i32, i32
  }
  func.func @transform_2(%arg0: i32, %arg1: i32) -> (i32, i32, i32) {
    %c0_i32 = arith.constant 0 : i32
    %c0_i32_0 = arith.constant 0 : i32
    return %arg0, %arg1, %c0_i32 : i32, i32, i32
  }
  func.func @transform_3(%arg0: i32, %arg1: i32) -> (i32, i32, i32) {
    %c0_i32 = arith.constant 0 : i32
    %c0_i32_0 = arith.constant 0 : i32
    %c0_i32_1 = arith.constant 0 : i32
    return %arg0, %c0_i32, %c0_i32_0 : i32, i32, i32
  }
}

</mosaic_0001>

<llo_original>
// kernel: tpu_custom_call.1
$region0: #{tpu_custom_call.1}
  #allocation0 [shape = 'u32[]', space=smem, size = 0x4, offset = 0x4, fixed_abs, tag = 'smem constant byte address 0x4 - core index']
  #allocation1 [shape = 'u32[144,128]{1,0:T(1,128)}', space=vmem, size = 0x12000, scoped, tag = 'internal scratch']
  %s0 = inlined_call_operand.hbm [shape: f32[98], index: 0, kind: input, shape index: {}]
  %s1 = inlined_call_operand.vmem [shape: s32[1,256], index: 1, kind: input, shape index: {}]
  %s2 = inlined_call_operand.hbm [shape: f32[2,4,256], index: 2, kind: input, shape index: {}]
  %s3 = inlined_call_operand.hbm [shape: f32[2,1,256], index: 3, kind: output, shape index: {}]
  %s4 = sld [smem:[#allocation0]]
  $region30: #{tpu_custom_call.1} parent=0
    _
  %s6 = ssub.s32 1, %s4
  %s7 = scalar_select 0, %s6, %s4
  $region1: #{tpu_custom_call.1} parent=0
    #allocation2 [shape = 'u8[512]{0}', space=smem, size = 0x200, scoped, tag = 'input window, operand 0, single buffered']
    #allocation3 [shape = 's32[1]{0}', space=sflag, size = 0x4, scoped, tag = 'scoped memory for tpu_custom_call.1']
    #allocation4 [shape = 's32[1]{0}', space=sflag, size = 0x4, scoped, tag = 'scoped memory for tpu_custom_call.1']
    #allocation5 [shape = 's32[1]{0}', space=sflag, size = 0x4, scoped, tag = 'scoped memory for tpu_custom_call.1']
    #allocation6 [shape = 'u8[8192]{0}', space=vmem, size = 0x2000, scoped, tag = 'input window, operand 2, single buffered']
    #allocation7 [shape = 'u8[2048]{0}', space=vmem, size = 0x800, scoped, tag = 'output window, operand 0, single buffered']
    %8 = vsyncpa [#allocation5], 0
    %9 = vsyncpa [#allocation3], 0
    %10 = vsyncpa [#allocation4], 0
    // Predicated region
    $region2: #{tpu_custom_call.1} parent=1 // pred_check
      _
    $region3: #{tpu_custom_call.1} parent=1 // pred_check_branch
      %12 = sbr.rel (0) target = $region5
    $region4: #{tpu_custom_call.1} parent=1 // pred_region
      %s14 = ssub.s32 16, 16
      %15 = vsyncadd [#allocation5], %s14
      %18 = dma.hbm_to_smem %s0, 16, [#allocation2], [#allocation5]
    $region5: #{tpu_custom_call.1} parent=1 // pred_fallthru
      _
    // Predicated region
    $region6: #{tpu_custom_call.1} parent=1 // pred_check
      _
    $region7: #{tpu_custom_call.1} parent=1 // pred_check_branch
      %20 = sbr.rel (0) target = $region9
    $region8: #{tpu_custom_call.1} parent=1 // pred_region
      _
    $region9: #{tpu_custom_call.1} parent=1 // pred_fallthru
      _
    // Predicated region
    $region10: #{tpu_custom_call.1} parent=1 // pred_check
      _
    $region11: #{tpu_custom_call.1} parent=1 // pred_check_branch
      %22 = sbr.rel (0) target = $region13
    $region12: #{tpu_custom_call.1} parent=1 // pred_region
      %s24 = ssub.s32 256, 256
      %25 = vsyncadd [#allocation3], %s24
      %s26 = sshll.u32 [#allocation6], 4
      %s27 = int_to_ptr.vmem [resolvable:$true] %s26
      %32 = dma.hbm_to_vmem [thread:$0]  %s2, 256, %s27, [#allocation3], 128, 128, 8
    $region13: #{tpu_custom_call.1} parent=1 // pred_fallthru
      _
    // Predicated region
    $region14: #{tpu_custom_call.1} parent=1 // pred_check
      _
    $region15: #{tpu_custom_call.1} parent=1 // pred_check_branch
      %34 = sbr.rel (0) target = $region17
    $region16: #{tpu_custom_call.1} parent=1 // pred_region
      %35 = dma.done [#allocation5], 16
    $region17: #{tpu_custom_call.1} parent=1 // pred_fallthru
      _
    // Predicated region
    $region18: #{tpu_custom_call.1} parent=1 // pred_check
      _
    $region19: #{tpu_custom_call.1} parent=1 // pred_check_branch
      %37 = sbr.rel (0) target = $region21
    $region20: #{tpu_custom_call.1} parent=1 // pred_region
      %38 = dma.done [#allocation3], 256
    $region21: #{tpu_custom_call.1} parent=1 // pred_fallthru
      _
    %39 = sfence
    %v40 = vld [vmem:[#allocation6] sm:$0xff]
    %v41 = vld [vmem:[#allocation6 + $0x8] sm:$0xff]
    %v44 = vcombine.high %v40, %v40
    %v45 = vcombine.high %v41, %v41
    %vm48 = vcmask 1043456
    %v49 = vsel %vm48, %v40, 0.0
    %v50 = vrot.slane %v49, 4
    %v51 = vadd.f32 %v49, %v50
    %v52 = vrot.slane %v51, 2
    %v53 = vadd.f32 %v51, %v52
    %v54 = vrot.slane %v53, 1
    %v55 = vadd.f32 %v53, %v54
    %v56 = vsel %vm48, %v44, 0.0
    %v57 = vrot.slane %v56, 4
    %v58 = vadd.f32 %v56, %v57
    %v59 = vrot.slane %v58, 2
    %v60 = vadd.f32 %v58, %v59
    %v61 = vrot.slane %v60, 1
    %v62 = vadd.f32 %v60, %v61
    %v63 = vsel %vm48, %v41, 0.0
    %v64 = vrot.slane %v63, 4
    %v65 = vadd.f32 %v63, %v64
    %v66 = vrot.slane %v65, 2
    %v67 = vadd.f32 %v65, %v66
    %v68 = vrot.slane %v67, 1
    %v69 = vadd.f32 %v67, %v68
    %v70 = vsel %vm48, %v45, 0.0
    %v71 = vrot.slane %v70, 4
    %v72 = vadd.f32 %v70, %v71
    %v73 = vrot.slane %v72, 2
    %v74 = vadd.f32 %v72, %v73
    %v75 = vrot.slane %v74, 1
    %v76 = vadd.f32 %v74, %v75
    %v77 = vsel %vm48, %v40, -inf
    %v78 = vrot.slane %v77, 4
    %v79 = vmax.f32 %v77, %v78
    %v80 = vrot.slane %v79, 2
    %v81 = vmax.f32 %v79, %v80
    %v82 = vrot.slane %v81, 1
    %v83 = vmax.f32 %v81, %v82
    %v84 = vsel %vm48, %v44, -inf
    %v85 = vrot.slane %v84, 4
    %v86 = vmax.f32 %v84, %v85
    %v87 = vrot.slane %v86, 2
    %v88 = vmax.f32 %v86, %v87
    %v89 = vrot.slane %v88, 1
    %v90 = vmax.f32 %v88, %v89
    %v91 = vsel %vm48, %v41, -inf
    %v92 = vrot.slane %v91, 4
    %v93 = vmax.f32 %v91, %v92
    %v94 = vrot.slane %v93, 2
    %v95 = vmax.f32 %v93, %v94
    %v96 = vrot.slane %v95, 1
    %v97 = vmax.f32 %v95, %v96
    %v98 = vsel %vm48, %v45, -inf
    %v99 = vrot.slane %v98, 4
    %v100 = vmax.f32 %v98, %v99
    %v101 = vrot.slane %v100, 2
    %v102 = vmax.f32 %v100, %v101
    %v103 = vrot.slane %v102, 1
    %v104 = vmax.f32 %v102, %v103
    %v105 = vld [vmem:[%s1] sm:$0x3]
    %s106 = sld [smem:[#allocation2]]
    %s107 = sld [smem:[#allocation2 + $0x1]]
    %s108 = sld [smem:[#allocation2 + $0x2]]
    %s109 = sld [smem:[#allocation2 + $0x3]]
    %s110 = sld [smem:[#allocation2 + $0x4]]
    %s111 = sld [smem:[#allocation2 + $0x5]]
    %s112 = sld [smem:[#allocation2 + $0x6]]
    %s113 = sld [smem:[#allocation2 + $0x7]]
    %s114 = sld [smem:[#allocation2 + $0x8]]
    %s115 = sld [smem:[#allocation2 + $0x9]]
    %s116 = sld [smem:[#allocation2 + $0xa]]
    %s117 = sld [smem:[#allocation2 + $0xb]]
    %s118 = sld [smem:[#allocation2 + $0xc]]
    %s119 = sld [smem:[#allocation2 + $0xd]]
    %s120 = sld [smem:[#allocation2 + $0xe]]
    %s121 = sld [smem:[#allocation2 + $0xf]]
    %s122 = sld [smem:[#allocation2 + $0x10]]
    %s123 = sld [smem:[#allocation2 + $0x11]]
    %s124 = sld [smem:[#allocation2 + $0x12]]
    %s125 = sld [smem:[#allocation2 + $0x13]]
    %s126 = sld [smem:[#allocation2 + $0x14]]
    %s127 = sld [smem:[#allocation2 + $0x15]]
    %s128 = sld [smem:[#allocation2 + $0x16]]
    %s129 = sld [smem:[#allocation2 + $0x17]]
    %s130 = sld [smem:[#allocation2 + $0x18]]
    %s131 = sld [smem:[#allocation2 + $0x19]]
    %s132 = sld [smem:[#allocation2 + $0x1a]]
    %s133 = sld [smem:[#allocation2 + $0x1b]]
    %s134 = sld [smem:[#allocation2 + $0x1c]]
    %s135 = sld [smem:[#allocation2 + $0x1d]]
    %s136 = sld [smem:[#allocation2 + $0x1e]]
    %s137 = sld [smem:[#allocation2 + $0x1f]]
    %s138 = sld [smem:[#allocation2 + $0x20]]
    %s139 = sld [smem:[#allocation2 + $0x21]]
    %s140 = sld [smem:[#allocation2 + $0x22]]
    %s141 = sld [smem:[#allocation2 + $0x23]]
    %s142 = sld [smem:[#allocation2 + $0x24]]
    %s143 = sld [smem:[#allocation2 + $0x25]]
    %s144 = sld [smem:[#allocation2 + $0x26]]
    %s145 = sld [smem:[#allocation2 + $0x27]]
    %s146 = sld [smem:[#allocation2 + $0x28]]
    %s147 = sld [smem:[#allocation2 + $0x29]]
    %s148 = sld [smem:[#allocation2 + $0x2a]]
    %s149 = sld [smem:[#allocation2 + $0x2b]]
    %s150 = sld [smem:[#allocation2 + $0x2c]]
    %s151 = sld [smem:[#allocation2 + $0x2d]]
    %s152 = sld [smem:[#allocation2 + $0x2e]]
    %s153 = sld [smem:[#allocation2 + $0x2f]]
    %s154 = sld [smem:[#allocation2 + $0x30]]
    %s155 = sld [smem:[#allocation2 + $0x31]]
    %s156 = sld [smem:[#allocation2 + $0x32]]
    %s157 = sld [smem:[#allocation2 + $0x33]]
    %s158 = sld [smem:[#allocation2 + $0x34]]
    %s159 = sld [smem:[#allocation2 + $0x35]]
    %s160 = sld [smem:[#allocation2 + $0x36]]
    %s161 = sld [smem:[#allocation2 + $0x37]]
    %s162 = sld [smem:[#allocation2 + $0x38]]
    %s163 = sld [smem:[#allocation2 + $0x39]]
    %s164 = sld [smem:[#allocation2 + $0x3a]]
    %s165 = sld [smem:[#allocation2 + $0x3b]]
    %s166 = sld [smem:[#allocation2 + $0x3c]]
    %s167 = sld [smem:[#allocation2 + $0x3d]]
    %s168 = sld [smem:[#allocation2 + $0x3e]]
    %s169 = sld [smem:[#allocation2 + $0x3f]]
    %s170 = sld [smem:[#allocation2 + $0x40]]
    %s171 = sld [smem:[#allocation2 + $0x41]]
    %s172 = sld [smem:[#allocation2 + $0x42]]
    %s173 = sld [smem:[#allocation2 + $0x43]]
    %s174 = sld [smem:[#allocation2 + $0x44]]
    %s175 = sld [smem:[#allocation2 + $0x45]]
    %s176 = sld [smem:[#allocation2 + $0x46]]
    %s177 = sld [smem:[#allocation2 + $0x47]]
    %s178 = sld [smem:[#allocation2 + $0x48]]
    %s179 = sld [smem:[#allocation2 + $0x49]]
    %s180 = sld [smem:[#allocation2 + $0x4a]]
    %s181 = sld [smem:[#allocation2 + $0x4b]]
    %s182 = sld [smem:[#allocation2 + $0x4c]]
    %s183 = sld [smem:[#allocation2 + $0x4d]]
    %s184 = sld [smem:[#allocation2 + $0x4e]]
    %s185 = sld [smem:[#allocation2 + $0x4f]]
    %s186 = sld [smem:[#allocation2 + $0x50]]
    %s187 = sld [smem:[#allocation2 + $0x51]]
    %s188 = sld [smem:[#allocation2 + $0x52]]
    %s189 = sld [smem:[#allocation2 + $0x53]]
    %s190 = sld [smem:[#allocation2 + $0x54]]
    %s191 = sld [smem:[#allocation2 + $0x55]]
    %s192 = sld [smem:[#allocation2 + $0x56]]
    %s193 = sld [smem:[#allocation2 + $0x57]]
    %s194 = sld [smem:[#allocation2 + $0x58]]
    %s195 = sld [smem:[#allocation2 + $0x59]]
    %s196 = sld [smem:[#allocation2 + $0x5a]]
    %s197 = sld [smem:[#allocation2 + $0x5b]]
    %s198 = sld [smem:[#allocation2 + $0x5c]]
    %s199 = sld [smem:[#allocation2 + $0x5d]]
    %s200 = sld [smem:[#allocation2 + $0x5e]]
    %s201 = sld [smem:[#allocation2 + $0x5f]]
    %s202 = sld [smem:[#allocation2 + $0x60]]
    %s203 = sld [smem:[#allocation2 + $0x61]]
    %vm208 = vcmask 1041409
    %v209 = vsel %vm208, %v69, %v55
    %v210 = vsel %vm208, %v76, %v62
    %211 = vrot.lane.b32.xlu0 %v209, 3
    %v212 = vpop.permute.xlu0 %211
    %213 = vrot.lane.b32.xlu0 %v210, 3
    %v214 = vpop.permute.xlu0 %213
    %vm215 = vcmask 23552
    %v216 = vsel %vm215, %v212, %v214
    %v219 = vsel %vm215, 0.0, %v212
    %vm220 = vcmp.ge.s32.totalorder %v105, 3
    %v221 = vsel %vm220, 1, 0
    %v222 = vlaneseq
    %v223 = vshrl.u32 %v222, 7
    %v224 = vsub.s32 0, %v223
    %v225 = vrot.slane %v221, %v224
    %v226 = vlaneseq
    %v227 = vshrl.u32 %v226, 7
    %v228 = vsub.s32 1, %v227
    %v229 = vrot.slane %v221, %v228
    %vm230 = vcmp.eq.s32.totalorder %v225, 1
    %vm231 = vcmp.eq.s32.totalorder %v229, 1
    %v232 = vsel %vm230, %v219, 0.0
    %v233 = vsel %vm231, %v216, 0.0
    %234 = vrot.lane.b32.xlu0 %v209, 2
    %v235 = vpop.permute.xlu0 %234
    %236 = vrot.lane.b32.xlu0 %v210, 2
    %v237 = vpop.permute.xlu0 %236
    %vm238 = vcmask 15360
    %v239 = vsel %vm238, %v235, %v237
    %v242 = vsel %vm238, 0.0, %v235
    %vm243 = vcmp.ge.s32.totalorder %v105, 2
    %v244 = vsel %vm243, 1, 0
    %v245 = vlaneseq
    %v246 = vshrl.u32 %v245, 7
    %v247 = vsub.s32 0, %v246
    %v248 = vrot.slane %v244, %v247
    %v249 = vlaneseq
    %v250 = vshrl.u32 %v249, 7
    %v251 = vsub.s32 1, %v250
    %v252 = vrot.slane %v244, %v251
    %vm253 = vcmp.eq.s32.totalorder %v248, 1
    %vm254 = vcmp.eq.s32.totalorder %v252, 1
    %v255 = vsel %vm253, %v242, 0.0
    %v256 = vsel %vm254, %v239, 0.0
    %257 = vrot.lane.b32.xlu0 %v209, 1
    %v258 = vpop.permute.xlu0 %257
    %259 = vrot.lane.b32.xlu0 %v210, 1
    %v260 = vpop.permute.xlu0 %259
    %vm261 = vcmask 7168
    %v262 = vsel %vm261, %v258, %v260
    %v265 = vsel %vm261, 0.0, %v258
    %vm266 = vcmp.ge.s32.totalorder %v105, 1
    %v267 = vsel %vm266, 1, 0
    %v268 = vlaneseq
    %v269 = vshrl.u32 %v268, 7
    %v270 = vsub.s32 0, %v269
    %v271 = vrot.slane %v267, %v270
    %v272 = vlaneseq
    %v273 = vshrl.u32 %v272, 7
    %v274 = vsub.s32 1, %v273
    %v275 = vrot.slane %v267, %v274
    %vm276 = vcmp.eq.s32.totalorder %v271, 1
    %vm277 = vcmp.eq.s32.totalorder %v275, 1
    %v278 = vsel %vm276, %v265, 0.0
    %v279 = vsel %vm277, %v262, 0.0
    %280 = vrot.lane.b32.xlu0 %v209, 127
    %v281 = vpop.permute.xlu0 %280
    %282 = vrot.lane.b32.xlu0 %v210, 127
    %v283 = vpop.permute.xlu0 %282
    %vm284 = vcmask 1039360
    %v285 = vsel %vm284, %v281, %v283
    %v288 = vsel %vm284, %v283, 0.0
    %vm289 = vcmp.lt.s32.totalorder %v105, 15
    %v290 = vsel %vm289, 1, 0
    %v291 = vlaneseq
    %v292 = vshrl.u32 %v291, 7
    %v293 = vsub.s32 0, %v292
    %v294 = vrot.slane %v290, %v293
    %v295 = vlaneseq
    %v296 = vshrl.u32 %v295, 7
    %v297 = vsub.s32 1, %v296
    %v298 = vrot.slane %v290, %v297
    %vm299 = vcmp.eq.s32.totalorder %v294, 1
    %vm300 = vcmp.eq.s32.totalorder %v298, 1
    %v301 = vsel %vm299, %v285, 0.0
    %v302 = vsel %vm300, %v288, 0.0
    %303 = vrot.lane.b32.xlu0 %v209, 126
    %v304 = vpop.permute.xlu0 %303
    %305 = vrot.lane.b32.xlu0 %v210, 126
    %v306 = vpop.permute.xlu0 %305
    %vm307 = vcmask 1031168
    %v308 = vsel %vm307, %v304, %v306
    %v311 = vsel %vm307, %v306, 0.0
    %vm312 = vcmp.lt.s32.totalorder %v105, 14
    %v313 = vsel %vm312, 1, 0
    %v314 = vlaneseq
    %v315 = vshrl.u32 %v314, 7
    %v316 = vsub.s32 0, %v315
    %v317 = vrot.slane %v313, %v316
    %v318 = vlaneseq
    %v319 = vshrl.u32 %v318, 7
    %v320 = vsub.s32 1, %v319
    %v321 = vrot.slane %v313, %v320
    %vm322 = vcmp.eq.s32.totalorder %v317, 1
    %vm323 = vcmp.eq.s32.totalorder %v321, 1
    %v324 = vsel %vm322, %v308, 0.0
    %v325 = vsel %vm323, %v311, 0.0
    %326 = vrot.lane.b32.xlu0 %v209, 125
    %v327 = vpop.permute.xlu0 %326
    %328 = vrot.lane.b32.xlu0 %v210, 125
    %v329 = vpop.permute.xlu0 %328
    %vm330 = vcmask 1022976
    %v331 = vsel %vm330, %v327, %v329
    %v334 = vsel %vm330, %v329, 0.0
    %vm335 = vcmp.lt.s32.totalorder %v105, 13
    %v336 = vsel %vm335, 1, 0
    %v337 = vlaneseq
    %v338 = vshrl.u32 %v337, 7
    %v339 = vsub.s32 0, %v338
    %v340 = vrot.slane %v336, %v339
    %v341 = vlaneseq
    %v342 = vshrl.u32 %v341, 7
    %v343 = vsub.s32 1, %v342
    %v344 = vrot.slane %v336, %v343
    %vm345 = vcmp.eq.s32.totalorder %v340, 1
    %vm346 = vcmp.eq.s32.totalorder %v344, 1
    %v347 = vsel %vm345, %v331, 0.0
    %v348 = vsel %vm346, %v334, 0.0
    %v349 = vstv %s106
    %v350 = vmul.f32 %v232, %v349
    %v351 = vmul.f32 %v233, %v349
    %v352 = vstv %s107
    %v353 = vmul.f32 %v255, %v352
    %v354 = vmul.f32 %v256, %v352
    %v355 = vadd.f32 %v350, %v353
    %v356 = vadd.f32 %v351, %v354
    %v357 = vstv %s108
    %v358 = vmul.f32 %v278, %v357
    %v359 = vmul.f32 %v279, %v357
    %v360 = vadd.f32 %v355, %v358
    %v361 = vadd.f32 %v356, %v359
    %v362 = vstv %s109
    %v363 = vmul.f32 %v55, %v362
    %v364 = vmul.f32 %v62, %v362
    %v365 = vmul.f32 %v69, %v362
    %v366 = vmul.f32 %v76, %v362
    %v371 = vsel %vm208, %v365, %v363
    %v372 = vsel %vm208, %v366, %v364
    %v375 = vadd.f32 %v360, %v371
    %v376 = vadd.f32 %v361, %v372
    %v377 = vstv %s110
    %v378 = vmul.f32 %v301, %v377
    %v379 = vmul.f32 %v302, %v377
    %v380 = vadd.f32 %v375, %v378
    %v381 = vadd.f32 %v376, %v379
    %v382 = vstv %s111
    %v383 = vmul.f32 %v324, %v382
    %v384 = vmul.f32 %v325, %v382
    %v385 = vadd.f32 %v380, %v383
    %v386 = vadd.f32 %v381, %v384
    %v387 = vstv %s112
    %v388 = vmul.f32 %v347, %v387
    %v389 = vmul.f32 %v348, %v387
    %v390 = vadd.f32 %v385, %v388
    %v391 = vadd.f32 %v386, %v389
    %394 = vrot.lane.b32.xlu0 %v390, 48
    %v395 = vpop.permute.xlu0 %394
    %396 = vrot.lane.b32.xlu0 %v391, 48
    %v397 = vpop.permute.xlu0 %396
    %vm398 = vcmask 392192
    %v399 = vsel %vm398, %v395, %v397
    %v402 = vsel %vm398, 0.0, %v395
    %v403 = vadd.f32 %v402, 0.0
    %v404 = vadd.f32 %v399, 0.0
    %v405 = vstv %s113
    %v406 = vmul.f32 %v232, %v405
    %v407 = vmul.f32 %v233, %v405
    %v408 = vstv %s114
    %v409 = vmul.f32 %v255, %v408
    %v410 = vmul.f32 %v256, %v408
    %v411 = vadd.f32 %v406, %v409
    %v412 = vadd.f32 %v407, %v410
    %v413 = vstv %s115
    %v414 = vmul.f32 %v278, %v413
    %v415 = vmul.f32 %v279, %v413
    %v416 = vadd.f32 %v411, %v414
    %v417 = vadd.f32 %v412, %v415
    %v418 = vstv %s116
    %v419 = vmul.f32 %v55, %v418
    %v420 = vmul.f32 %v62, %v418
    %v421 = vmul.f32 %v69, %v418
    %v422 = vmul.f32 %v76, %v418
    %v427 = vsel %vm208, %v421, %v419
    %v428 = vsel %vm208, %v422, %v420
    %v431 = vadd.f32 %v416, %v427
    %v432 = vadd.f32 %v417, %v428
    %v433 = vstv %s117
    %v434 = vmul.f32 %v301, %v433
    %v435 = vmul.f32 %v302, %v433
    %v436 = vadd.f32 %v431, %v434
    %v437 = vadd.f32 %v432, %v435
    %v438 = vstv %s118
    %v439 = vmul.f32 %v324, %v438
    %v440 = vmul.f32 %v325, %v438
    %v441 = vadd.f32 %v436, %v439
    %v442 = vadd.f32 %v437, %v440
    %v443 = vstv %s119
    %v444 = vmul.f32 %v347, %v443
    %v445 = vmul.f32 %v348, %v443
    %v446 = vadd.f32 %v441, %v444
    %v447 = vadd.f32 %v442, %v445
    %450 = vrot.lane.b32.xlu0 %v446, 32
    %v451 = vpop.permute.xlu0 %450
    %452 = vrot.lane.b32.xlu0 %v447, 32
    %v453 = vpop.permute.xlu0 %452
    %vm454 = vcmask 261120
    %v455 = vsel %vm454, %v451, %v453
    %v458 = vsel %vm454, 0.0, %v451
    %v459 = vadd.f32 %v403, %v458
    %v460 = vadd.f32 %v404, %v455
    %v461 = vstv %s120
    %v462 = vmul.f32 %v232, %v461
    %v463 = vmul.f32 %v233, %v461
    %v464 = vstv %s121
    %v465 = vmul.f32 %v255, %v464
    %v466 = vmul.f32 %v256, %v464
    %v467 = vadd.f32 %v462, %v465
    %v468 = vadd.f32 %v463, %v466
    %v469 = vstv %s122
    %v470 = vmul.f32 %v278, %v469
    %v471 = vmul.f32 %v279, %v469
    %v472 = vadd.f32 %v467, %v470
    %v473 = vadd.f32 %v468, %v471
    %v474 = vstv %s123
    %v475 = vmul.f32 %v55, %v474
    %v476 = vmul.f32 %v62, %v474
    %v477 = vmul.f32 %v69, %v474
    %v478 = vmul.f32 %v76, %v474
    %v483 = vsel %vm208, %v477, %v475
    %v484 = vsel %vm208, %v478, %v476
    %v487 = vadd.f32 %v472, %v483
    %v488 = vadd.f32 %v473, %v484
    %v489 = vstv %s124
    %v490 = vmul.f32 %v301, %v489
    %v491 = vmul.f32 %v302, %v489
    %v492 = vadd.f32 %v487, %v490
    %v493 = vadd.f32 %v488, %v491
    %v494 = vstv %s125
    %v495 = vmul.f32 %v324, %v494
    %v496 = vmul.f32 %v325, %v494
    %v497 = vadd.f32 %v492, %v495
    %v498 = vadd.f32 %v493, %v496
    %v499 = vstv %s126
    %v500 = vmul.f32 %v347, %v499
    %v501 = vmul.f32 %v348, %v499
    %v502 = vadd.f32 %v497, %v500
    %v503 = vadd.f32 %v498, %v501
    %506 = vrot.lane.b32.xlu0 %v502, 16
    %v507 = vpop.permute.xlu0 %506
    %508 = vrot.lane.b32.xlu0 %v503, 16
    %v509 = vpop.permute.xlu0 %508
    %vm510 = vcmask 130048
    %v511 = vsel %vm510, %v507, %v509
    %v514 = vsel %vm510, 0.0, %v507
    %v515 = vadd.f32 %v459, %v514
    %v516 = vadd.f32 %v460, %v511
    %v517 = vstv %s127
    %v518 = vmul.f32 %v232, %v517
    %v519 = vmul.f32 %v233, %v517
    %v520 = vstv %s128
    %v521 = vmul.f32 %v255, %v520
    %v522 = vmul.f32 %v256, %v520
    %v523 = vadd.f32 %v518, %v521
    %v524 = vadd.f32 %v519, %v522
    %v525 = vstv %s129
    %v526 = vmul.f32 %v278, %v525
    %v527 = vmul.f32 %v279, %v525
    %v528 = vadd.f32 %v523, %v526
    %v529 = vadd.f32 %v524, %v527
    %v530 = vstv %s130
    %v531 = vmul.f32 %v55, %v530
    %v532 = vmul.f32 %v62, %v530
    %v533 = vmul.f32 %v69, %v530
    %v534 = vmul.f32 %v76, %v530
    %v539 = vsel %vm208, %v533, %v531
    %v540 = vsel %vm208, %v534, %v532
    %v543 = vadd.f32 %v528, %v539
    %v544 = vadd.f32 %v529, %v540
    %v545 = vstv %s131
    %v546 = vmul.f32 %v301, %v545
    %v547 = vmul.f32 %v302, %v545
    %v548 = vadd.f32 %v543, %v546
    %v549 = vadd.f32 %v544, %v547
    %v550 = vstv %s132
    %v551 = vmul.f32 %v324, %v550
    %v552 = vmul.f32 %v325, %v550
    %v553 = vadd.f32 %v548, %v551
    %v554 = vadd.f32 %v549, %v552
    %v555 = vstv %s133
    %v556 = vmul.f32 %v347, %v555
    %v557 = vmul.f32 %v348, %v555
    %v558 = vadd.f32 %v553, %v556
    %v559 = vadd.f32 %v554, %v557
    %v560 = vadd.f32 %v515, %v558
    %v561 = vadd.f32 %v516, %v559
    %v562 = vstv %s134
    %v563 = vmul.f32 %v232, %v562
    %v564 = vmul.f32 %v233, %v562
    %v565 = vstv %s135
    %v566 = vmul.f32 %v255, %v565
    %v567 = vmul.f32 %v256, %v565
    %v568 = vadd.f32 %v563, %v566
    %v569 = vadd.f32 %v564, %v567
    %v570 = vstv %s136
    %v571 = vmul.f32 %v278, %v570
    %v572 = vmul.f32 %v279, %v570
    %v573 = vadd.f32 %v568, %v571
    %v574 = vadd.f32 %v569, %v572
    %v575 = vstv %s137
    %v576 = vmul.f32 %v55, %v575
    %v577 = vmul.f32 %v62, %v575
    %v578 = vmul.f32 %v69, %v575
    %v579 = vmul.f32 %v76, %v575
    %v584 = vsel %vm208, %v578, %v576
    %v585 = vsel %vm208, %v579, %v577
    %v588 = vadd.f32 %v573, %v584
    %v589 = vadd.f32 %v574, %v585
    %v590 = vstv %s138
    %v591 = vmul.f32 %v301, %v590
    %v592 = vmul.f32 %v302, %v590
    %v593 = vadd.f32 %v588, %v591
    %v594 = vadd.f32 %v589, %v592
    %v595 = vstv %s139
    %v596 = vmul.f32 %v324, %v595
    %v597 = vmul.f32 %v325, %v595
    %v598 = vadd.f32 %v593, %v596
    %v599 = vadd.f32 %v594, %v597
    %v600 = vstv %s140
    %v601 = vmul.f32 %v347, %v600
    %v602 = vmul.f32 %v348, %v600
    %v603 = vadd.f32 %v598, %v601
    %v604 = vadd.f32 %v599, %v602
    %607 = vrot.lane.b32.xlu0 %v603, 112
    %v608 = vpop.permute.xlu0 %607
    %609 = vrot.lane.b32.xlu0 %v604, 112
    %v610 = vpop.permute.xlu0 %609
    %vm611 = vcmask 916480
    %v612 = vsel %vm611, %v608, %v610
    %v615 = vsel %vm611, %v610, 0.0
    %v616 = vadd.f32 %v560, %v612
    %v617 = vadd.f32 %v561, %v615
    %v618 = vstv %s141
    %v619 = vmul.f32 %v232, %v618
    %v620 = vmul.f32 %v233, %v618
    %v621 = vstv %s142
    %v622 = vmul.f32 %v255, %v621
    %v623 = vmul.f32 %v256, %v621
    %v624 = vadd.f32 %v619, %v622
    %v625 = vadd.f32 %v620, %v623
    %v626 = vstv %s143
    %v627 = vmul.f32 %v278, %v626
    %v628 = vmul.f32 %v279, %v626
    %v629 = vadd.f32 %v624, %v627
    %v630 = vadd.f32 %v625, %v628
    %v631 = vstv %s144
    %v632 = vmul.f32 %v55, %v631
    %v633 = vmul.f32 %v62, %v631
    %v634 = vmul.f32 %v69, %v631
    %v635 = vmul.f32 %v76, %v631
    %v640 = vsel %vm208, %v634, %v632
    %v641 = vsel %vm208, %v635, %v633
    %v644 = vadd.f32 %v629, %v640
    %v645 = vadd.f32 %v630, %v641
    %v646 = vstv %s145
    %v647 = vmul.f32 %v301, %v646
    %v648 = vmul.f32 %v302, %v646
    %v649 = vadd.f32 %v644, %v647
    %v650 = vadd.f32 %v645, %v648
    %v651 = vstv %s146
    %v652 = vmul.f32 %v324, %v651
    %v653 = vmul.f32 %v325, %v651
    %v654 = vadd.f32 %v649, %v652
    %v655 = vadd.f32 %v650, %v653
    %v656 = vstv %s147
    %v657 = vmul.f32 %v347, %v656
    %v658 = vmul.f32 %v348, %v656
    %v659 = vadd.f32 %v654, %v657
    %v660 = vadd.f32 %v655, %v658
    %663 = vrot.lane.b32.xlu0 %v659, 96
    %v664 = vpop.permute.xlu0 %663
    %665 = vrot.lane.b32.xlu0 %v660, 96
    %v666 = vpop.permute.xlu0 %665
    %vm667 = vcmask 785408
    %v668 = vsel %vm667, %v664, %v666
    %v671 = vsel %vm667, %v666, 0.0
    %v672 = vadd.f32 %v616, %v668
    %v673 = vadd.f32 %v617, %v671
    %v674 = vstv %s148
    %v675 = vmul.f32 %v232, %v674
    %v676 = vmul.f32 %v233, %v674
    %v677 = vstv %s149
    %v678 = vmul.f32 %v255, %v677
    %v679 = vmul.f32 %v256, %v677
    %v680 = vadd.f32 %v675, %v678
    %v681 = vadd.f32 %v676, %v679
    %v682 = vstv %s150
    %v683 = vmul.f32 %v278, %v682
    %v684 = vmul.f32 %v279, %v682
    %v685 = vadd.f32 %v680, %v683
    %v686 = vadd.f32 %v681, %v684
    %v687 = vstv %s151
    %v688 = vmul.f32 %v55, %v687
    %v689 = vmul.f32 %v62, %v687
    %v690 = vmul.f32 %v69, %v687
    %v691 = vmul.f32 %v76, %v687
    %v696 = vsel %vm208, %v690, %v688
    %v697 = vsel %vm208, %v691, %v689
    %v700 = vadd.f32 %v685, %v696
    %v701 = vadd.f32 %v686, %v697
    %v702 = vstv %s152
    %v703 = vmul.f32 %v301, %v702
    %v704 = vmul.f32 %v302, %v702
    %v705 = vadd.f32 %v700, %v703
    %v706 = vadd.f32 %v701, %v704
    %v707 = vstv %s153
    %v708 = vmul.f32 %v324, %v707
    %v709 = vmul.f32 %v325, %v707
    %v710 = vadd.f32 %v705, %v708
    %v711 = vadd.f32 %v706, %v709
    %v712 = vstv %s154
    %v713 = vmul.f32 %v347, %v712
    %v714 = vmul.f32 %v348, %v712
    %v715 = vadd.f32 %v710, %v713
    %v716 = vadd.f32 %v711, %v714
    %719 = vrot.lane.b32.xlu0 %v715, 80
    %v720 = vpop.permute.xlu0 %719
    %721 = vrot.lane.b32.xlu0 %v716, 80
    %v722 = vpop.permute.xlu0 %721
    %vm723 = vcmask 654336
    %v724 = vsel %vm723, %v720, %v722
    %v727 = vsel %vm723, %v722, 0.0
    %v728 = vadd.f32 %v672, %v724
    %v729 = vadd.f32 %v673, %v727
    %v734 = vsel %vm208, %v97, %v83
    %v735 = vsel %vm208, %v104, %v90
    %736 = vrot.lane.b32.xlu0 %v734, 3
    %v737 = vpop.permute.xlu0 %736
    %738 = vrot.lane.b32.xlu0 %v735, 3
    %v739 = vpop.permute.xlu0 %738
    %v740 = vsel %vm215, %v737, %v739
    %v743 = vsel %vm215, 0.0, %v737
    %v744 = vsel %vm230, %v743, 0.0
    %v745 = vsel %vm231, %v740, 0.0
    %746 = vrot.lane.b32.xlu0 %v734, 2
    %v747 = vpop.permute.xlu0 %746
    %748 = vrot.lane.b32.xlu0 %v735, 2
    %v749 = vpop.permute.xlu0 %748
    %v750 = vsel %vm238, %v747, %v749
    %v753 = vsel %vm238, 0.0, %v747
    %v754 = vsel %vm253, %v753, 0.0
    %v755 = vsel %vm254, %v750, 0.0
    %756 = vrot.lane.b32.xlu0 %v734, 1
    %v757 = vpop.permute.xlu0 %756
    %758 = vrot.lane.b32.xlu0 %v735, 1
    %v759 = vpop.permute.xlu0 %758
    %v760 = vsel %vm261, %v757, %v759
    %v763 = vsel %vm261, 0.0, %v757
    %v764 = vsel %vm276, %v763, 0.0
    %v765 = vsel %vm277, %v760, 0.0
    %766 = vrot.lane.b32.xlu0 %v734, 127
    %v767 = vpop.permute.xlu0 %766
    %768 = vrot.lane.b32.xlu0 %v735, 127
    %v769 = vpop.permute.xlu0 %768
    %v770 = vsel %vm284, %v767, %v769
    %v773 = vsel %vm284, %v769, 0.0
    %v774 = vsel %vm299, %v770, 0.0
    %v775 = vsel %vm300, %v773, 0.0
    %776 = vrot.lane.b32.xlu0 %v734, 126
    %v777 = vpop.permute.xlu0 %776
    %778 = vrot.lane.b32.xlu0 %v735, 126
    %v779 = vpop.permute.xlu0 %778
    %v780 = vsel %vm307, %v777, %v779
    %v783 = vsel %vm307, %v779, 0.0
    %v784 = vsel %vm322, %v780, 0.0
    %v785 = vsel %vm323, %v783, 0.0
    %786 = vrot.lane.b32.xlu0 %v734, 125
    %v787 = vpop.permute.xlu0 %786
    %788 = vrot.lane.b32.xlu0 %v735, 125
    %v789 = vpop.permute.xlu0 %788
    %v790 = vsel %vm330, %v787, %v789
    %v793 = vsel %vm330, %v789, 0.0
    %v794 = vsel %vm345, %v790, 0.0
    %v795 = vsel %vm346, %v793, 0.0
    %v796 = vstv %s155
    %v797 = vmul.f32 %v744, %v796
    %v798 = vmul.f32 %v745, %v796
    %v799 = vstv %s156
    %v800 = vmul.f32 %v754, %v799
    %v801 = vmul.f32 %v755, %v799
    %v802 = vadd.f32 %v797, %v800
    %v803 = vadd.f32 %v798, %v801
    %v804 = vstv %s157
    %v805 = vmul.f32 %v764, %v804
    %v806 = vmul.f32 %v765, %v804
    %v807 = vadd.f32 %v802, %v805
    %v808 = vadd.f32 %v803, %v806
    %v809 = vstv %s158
    %v810 = vmul.f32 %v83, %v809
    %v811 = vmul.f32 %v90, %v809
    %v812 = vmul.f32 %v97, %v809
    %v813 = vmul.f32 %v104, %v809
    %v818 = vsel %vm208, %v812, %v810
    %v819 = vsel %vm208, %v813, %v811
    %v822 = vadd.f32 %v807, %v818
    %v823 = vadd.f32 %v808, %v819
    %v824 = vstv %s159
    %v825 = vmul.f32 %v774, %v824
    %v826 = vmul.f32 %v775, %v824
    %v827 = vadd.f32 %v822, %v825
    %v828 = vadd.f32 %v823, %v826
    %v829 = vstv %s160
    %v830 = vmul.f32 %v784, %v829
    %v831 = vmul.f32 %v785, %v829
    %v832 = vadd.f32 %v827, %v830
    %v833 = vadd.f32 %v828, %v831
    %v834 = vstv %s161
    %v835 = vmul.f32 %v794, %v834
    %v836 = vmul.f32 %v795, %v834
    %v837 = vadd.f32 %v832, %v835
    %v838 = vadd.f32 %v833, %v836
    %841 = vrot.lane.b32.xlu0 %v837, 48
    %v842 = vpop.permute.xlu0 %841
    %843 = vrot.lane.b32.xlu0 %v838, 48
    %v844 = vpop.permute.xlu0 %843
    %v845 = vsel %vm398, %v842, %v844
    %v848 = vsel %vm398, 0.0, %v842
    %v849 = vadd.f32 %v848, 0.0
    %v850 = vadd.f32 %v845, 0.0
    %v851 = vstv %s162
    %v852 = vmul.f32 %v744, %v851
    %v853 = vmul.f32 %v745, %v851
    %v854 = vstv %s163
    %v855 = vmul.f32 %v754, %v854
    %v856 = vmul.f32 %v755, %v854
    %v857 = vadd.f32 %v852, %v855
    %v858 = vadd.f32 %v853, %v856
    %v859 = vstv %s164
    %v860 = vmul.f32 %v764, %v859
    %v861 = vmul.f32 %v765, %v859
    %v862 = vadd.f32 %v857, %v860
    %v863 = vadd.f32 %v858, %v861
    %v864 = vstv %s165
    %v865 = vmul.f32 %v83, %v864
    %v866 = vmul.f32 %v90, %v864
    %v867 = vmul.f32 %v97, %v864
    %v868 = vmul.f32 %v104, %v864
    %v873 = vsel %vm208, %v867, %v865
    %v874 = vsel %vm208, %v868, %v866
    %v877 = vadd.f32 %v862, %v873
    %v878 = vadd.f32 %v863, %v874
    %v879 = vstv %s166
    %v880 = vmul.f32 %v774, %v879
    %v881 = vmul.f32 %v775, %v879
    %v882 = vadd.f32 %v877, %v880
    %v883 = vadd.f32 %v878, %v881
    %v884 = vstv %s167
    %v885 = vmul.f32 %v784, %v884
    %v886 = vmul.f32 %v785, %v884
    %v887 = vadd.f32 %v882, %v885
    %v888 = vadd.f32 %v883, %v886
    %v889 = vstv %s168
    %v890 = vmul.f32 %v794, %v889
    %v891 = vmul.f32 %v795, %v889
    %v892 = vadd.f32 %v887, %v890
    %v893 = vadd.f32 %v888, %v891
    %896 = vrot.lane.b32.xlu0 %v892, 32
    %v897 = vpop.permute.xlu0 %896
    %898 = vrot.lane.b32.xlu0 %v893, 32
    %v899 = vpop.permute.xlu0 %898
    %v900 = vsel %vm454, %v897, %v899
    %v903 = vsel %vm454, 0.0, %v897
    %v904 = vadd.f32 %v849, %v903
    %v905 = vadd.f32 %v850, %v900
    %v906 = vstv %s169
    %v907 = vmul.f32 %v744, %v906
    %v908 = vmul.f32 %v745, %v906
    %v909 = vstv %s170
    %v910 = vmul.f32 %v754, %v909
    %v911 = vmul.f32 %v755, %v909
    %v912 = vadd.f32 %v907, %v910
    %v913 = vadd.f32 %v908, %v911
    %v914 = vstv %s171
    %v915 = vmul.f32 %v764, %v914
    %v916 = vmul.f32 %v765, %v914
    %v917 = vadd.f32 %v912, %v915
    %v918 = vadd.f32 %v913, %v916
    %v919 = vstv %s172
    %v920 = vmul.f32 %v83, %v919
    %v921 = vmul.f32 %v90, %v919
    %v922 = vmul.f32 %v97, %v919
    %v923 = vmul.f32 %v104, %v919
    %v928 = vsel %vm208, %v922, %v920
    %v929 = vsel %vm208, %v923, %v921
    %v932 = vadd.f32 %v917, %v928
    %v933 = vadd.f32 %v918, %v929
    %v934 = vstv %s173
    %v935 = vmul.f32 %v774, %v934
    %v936 = vmul.f32 %v775, %v934
    %v937 = vadd.f32 %v932, %v935
    %v938 = vadd.f32 %v933, %v936
    %v939 = vstv %s174
    %v940 = vmul.f32 %v784, %v939
    %v941 = vmul.f32 %v785, %v939
    %v942 = vadd.f32 %v937, %v940
    %v943 = vadd.f32 %v938, %v941
    %v944 = vstv %s175
    %v945 = vmul.f32 %v794, %v944
    %v946 = vmul.f32 %v795, %v944
    %v947 = vadd.f32 %v942, %v945
    %v948 = vadd.f32 %v943, %v946
    %951 = vrot.lane.b32.xlu0 %v947, 16
    %v952 = vpop.permute.xlu0 %951
    %953 = vrot.lane.b32.xlu0 %v948, 16
    %v954 = vpop.permute.xlu0 %953
    %v955 = vsel %vm510, %v952, %v954
    %v958 = vsel %vm510, 0.0, %v952
    %v959 = vadd.f32 %v904, %v958
    %v960 = vadd.f32 %v905, %v955
    %v961 = vstv %s176
    %v962 = vmul.f32 %v744, %v961
    %v963 = vmul.f32 %v745, %v961
    %v964 = vstv %s177
    %v965 = vmul.f32 %v754, %v964
    %v966 = vmul.f32 %v755, %v964
    %v967 = vadd.f32 %v962, %v965
    %v968 = vadd.f32 %v963, %v966
    %v969 = vstv %s178
    %v970 = vmul.f32 %v764, %v969
    %v971 = vmul.f32 %v765, %v969
    %v972 = vadd.f32 %v967, %v970
    %v973 = vadd.f32 %v968, %v971
    %v974 = vstv %s179
    %v975 = vmul.f32 %v83, %v974
    %v976 = vmul.f32 %v90, %v974
    %v977 = vmul.f32 %v97, %v974
    %v978 = vmul.f32 %v104, %v974
    %v983 = vsel %vm208, %v977, %v975
    %v984 = vsel %vm208, %v978, %v976
    %v987 = vadd.f32 %v972, %v983
    %v988 = vadd.f32 %v973, %v984
    %v989 = vstv %s180
    %v990 = vmul.f32 %v774, %v989
    %v991 = vmul.f32 %v775, %v989
    %v992 = vadd.f32 %v987, %v990
    %v993 = vadd.f32 %v988, %v991
    %v994 = vstv %s181
    %v995 = vmul.f32 %v784, %v994
    %v996 = vmul.f32 %v785, %v994
    %v997 = vadd.f32 %v992, %v995
    %v998 = vadd.f32 %v993, %v996
    %v999 = vstv %s182
    %v1000 = vmul.f32 %v794, %v999
    %v1001 = vmul.f32 %v795, %v999
    %v1002 = vadd.f32 %v997, %v1000
    %v1003 = vadd.f32 %v998, %v1001
    %v1004 = vadd.f32 %v959, %v1002
    %v1005 = vadd.f32 %v960, %v1003
    %v1006 = vstv %s183
    %v1007 = vmul.f32 %v744, %v1006
    %v1008 = vmul.f32 %v745, %v1006
    %v1009 = vstv %s184
    %v1010 = vmul.f32 %v754, %v1009
    %v1011 = vmul.f32 %v755, %v1009
    %v1012 = vadd.f32 %v1007, %v1010
    %v1013 = vadd.f32 %v1008, %v1011
    %v1014 = vstv %s185
    %v1015 = vmul.f32 %v764, %v1014
    %v1016 = vmul.f32 %v765, %v1014
    %v1017 = vadd.f32 %v1012, %v1015
    %v1018 = vadd.f32 %v1013, %v1016
    %v1019 = vstv %s186
    %v1020 = vmul.f32 %v83, %v1019
    %v1021 = vmul.f32 %v90, %v1019
    %v1022 = vmul.f32 %v97, %v1019
    %v1023 = vmul.f32 %v104, %v1019
    %v1028 = vsel %vm208, %v1022, %v1020
    %v1029 = vsel %vm208, %v1023, %v1021
    %v1032 = vadd.f32 %v1017, %v1028
    %v1033 = vadd.f32 %v1018, %v1029
    %v1034 = vstv %s187
    %v1035 = vmul.f32 %v774, %v1034
    %v1036 = vmul.f32 %v775, %v1034
    %v1037 = vadd.f32 %v1032, %v1035
    %v1038 = vadd.f32 %v1033, %v1036
    %v1039 = vstv %s188
    %v1040 = vmul.f32 %v784, %v1039
    %v1041 = vmul.f32 %v785, %v1039
    %v1042 = vadd.f32 %v1037, %v1040
    %v1043 = vadd.f32 %v1038, %v1041
    %v1044 = vstv %s189
    %v1045 = vmul.f32 %v794, %v1044
    %v1046 = vmul.f32 %v795, %v1044
    %v1047 = vadd.f32 %v1042, %v1045
    %v1048 = vadd.f32 %v1043, %v1046
    %1051 = vrot.lane.b32.xlu0 %v1047, 112
    %v1052 = vpop.permute.xlu0 %1051
    %1053 = vrot.lane.b32.xlu0 %v1048, 112
    %v1054 = vpop.permute.xlu0 %1053
    %v1055 = vsel %vm611, %v1052, %v1054
    %v1058 = vsel %vm611, %v1054, 0.0
    %v1059 = vadd.f32 %v1004, %v1055
    %v1060 = vadd.f32 %v1005, %v1058
    %v1061 = vstv %s190
    %v1062 = vmul.f32 %v744, %v1061
    %v1063 = vmul.f32 %v745, %v1061
    %v1064 = vstv %s191
    %v1065 = vmul.f32 %v754, %v1064
    %v1066 = vmul.f32 %v755, %v1064
    %v1067 = vadd.f32 %v1062, %v1065
    %v1068 = vadd.f32 %v1063, %v1066
    %v1069 = vstv %s192
    %v1070 = vmul.f32 %v764, %v1069
    %v1071 = vmul.f32 %v765, %v1069
    %v1072 = vadd.f32 %v1067, %v1070
    %v1073 = vadd.f32 %v1068, %v1071
    %v1074 = vstv %s193
    %v1075 = vmul.f32 %v83, %v1074
    %v1076 = vmul.f32 %v90, %v1074
    %v1077 = vmul.f32 %v97, %v1074
    %v1078 = vmul.f32 %v104, %v1074
    %v1083 = vsel %vm208, %v1077, %v1075
    %v1084 = vsel %vm208, %v1078, %v1076
    %v1087 = vadd.f32 %v1072, %v1083
    %v1088 = vadd.f32 %v1073, %v1084
    %v1089 = vstv %s194
    %v1090 = vmul.f32 %v774, %v1089
    %v1091 = vmul.f32 %v775, %v1089
    %v1092 = vadd.f32 %v1087, %v1090
    %v1093 = vadd.f32 %v1088, %v1091
    %v1094 = vstv %s195
    %v1095 = vmul.f32 %v784, %v1094
    %v1096 = vmul.f32 %v785, %v1094
    %v1097 = vadd.f32 %v1092, %v1095
    %v1098 = vadd.f32 %v1093, %v1096
    %v1099 = vstv %s196
    %v1100 = vmul.f32 %v794, %v1099
    %v1101 = vmul.f32 %v795, %v1099
    %v1102 = vadd.f32 %v1097, %v1100
    %v1103 = vadd.f32 %v1098, %v1101
    %1106 = vrot.lane.b32.xlu0 %v1102, 96
    %v1107 = vpop.permute.xlu0 %1106
    %1108 = vrot.lane.b32.xlu0 %v1103, 96
    %v1109 = vpop.permute.xlu0 %1108
    %v1110 = vsel %vm667, %v1107, %v1109
    %v1113 = vsel %vm667, %v1109, 0.0
    %v1114 = vadd.f32 %v1059, %v1110
    %v1115 = vadd.f32 %v1060, %v1113
    %v1116 = vstv %s197
    %v1117 = vmul.f32 %v744, %v1116
    %v1118 = vmul.f32 %v745, %v1116
    %v1119 = vstv %s198
    %v1120 = vmul.f32 %v754, %v1119
    %v1121 = vmul.f32 %v755, %v1119
    %v1122 = vadd.f32 %v1117, %v1120
    %v1123 = vadd.f32 %v1118, %v1121
    %v1124 = vstv %s199
    %v1125 = vmul.f32 %v764, %v1124
    %v1126 = vmul.f32 %v765, %v1124
    %v1127 = vadd.f32 %v1122, %v1125
    %v1128 = vadd.f32 %v1123, %v1126
    %v1129 = vstv %s200
    %v1130 = vmul.f32 %v83, %v1129
    %v1131 = vmul.f32 %v90, %v1129
    %v1132 = vmul.f32 %v97, %v1129
    %v1133 = vmul.f32 %v104, %v1129
    %v1138 = vsel %vm208, %v1132, %v1130
    %v1139 = vsel %vm208, %v1133, %v1131
    %v1142 = vadd.f32 %v1127, %v1138
    %v1143 = vadd.f32 %v1128, %v1139
    %v1144 = vstv %s201
    %v1145 = vmul.f32 %v774, %v1144
    %v1146 = vmul.f32 %v775, %v1144
    %v1147 = vadd.f32 %v1142, %v1145
    %v1148 = vadd.f32 %v1143, %v1146
    %v1149 = vstv %s202
    %v1150 = vmul.f32 %v784, %v1149
    %v1151 = vmul.f32 %v785, %v1149
    %v1152 = vadd.f32 %v1147, %v1150
    %v1153 = vadd.f32 %v1148, %v1151
    %v1154 = vstv %s203
    %v1155 = vmul.f32 %v794, %v1154
    %v1156 = vmul.f32 %v795, %v1154
    %v1157 = vadd.f32 %v1152, %v1155
    %v1158 = vadd.f32 %v1153, %v1156
    %1161 = vrot.lane.b32.xlu0 %v1157, 80
    %v1162 = vpop.permute.xlu0 %1161
    %1163 = vrot.lane.b32.xlu0 %v1158, 80
    %v1164 = vpop.permute.xlu0 %1163
    %v1165 = vsel %vm723, %v1162, %v1164
    %v1168 = vsel %vm723, %v1164, 0.0
    %v1169 = vadd.f32 %v1114, %v1165
    %v1170 = vadd.f32 %v1115, %v1168
    %v1171 = vadd.f32 %v728, %v1169
    %v1172 = vadd.f32 %v729, %v1170
    %v1173 = vsub.f32 0.0, %v1171
    %v1174 = vsub.f32 0.0, %v1172
    %v1175 = vmul.f32 %v1173, 1.442695
    %v1176 = vpow.pop %v1175
    %v1177 = vmul.f32 %v1174, 1.442695
    %v1178 = vpow.pop %v1177
    %v1179 = vadd.f32 %v1176, 1.0
    %v1180 = vadd.f32 %v1178, 1.0
    %v1181 = vrcp.pop %v1179
    %v1182 = vmul.f32 1.0, %v1181
    %v1183 = vrcp.pop %v1180
    %v1184 = vmul.f32 1.0, %v1183
    %v1187 = vcombine.low %v1182, %v1184
    %v1189 = vunpack.c.l.s4 1966171168
    %v1190 = vunpack.c.0.s8 %v1189
    %v1191 = vlaneseq
    %v1192 = vshrl.u32 %v1191, 7
    %v1193 = vsub.s32 %v1190, %v1192
    %v1194 = vrot.slane %v1187, %v1193
    %v1195 = vcombine.high %v1194, %v1194
    %v1197 = vunpack.c.l.s4 1966171168
    %v1198 = vunpack.c.0.s8 %v1197
    %v1199 = vlaneseq
    %v1200 = vshrl.u32 %v1199, 7
    %v1201 = vsub.s32 %v1198, %v1200
    %v1202 = vrot.slane %v1194, %v1201
    %v1204 = vunpack.c.l.s4 1966171168
    %v1205 = vunpack.c.0.s8 %v1204
    %v1206 = vlaneseq
    %v1207 = vshrl.u32 %v1206, 7
    %v1208 = vsub.s32 %v1205, %v1207
    %v1209 = vrot.slane %v1195, %v1208
    %v1212 = vlaneseq
    %vm1213 = vcmp.ge.s32.totalorder %v1212, 0
    %vm1214 = vcmp.lt.s32.totalorder %v1212, 256
    %vm1215 = vmand %vm1213, %vm1214
    %1216 = vst.msk [vmem:[#allocation7] sm:$0x3] %vm1215, %v1202
    %1217 = vst.msk [vmem:[#allocation7 + $0x2] sm:$0x3] %vm1215, %v1209
    // Predicated region
    $region22: #{tpu_custom_call.1} parent=1 // pred_check
      _
    $region23: #{tpu_custom_call.1} parent=1 // pred_check_branch
      %1219 = sbr.rel (0) target = $region25
    $region24: #{tpu_custom_call.1} parent=1 // pred_region
      %s1221 = ssub.s32 64, 64
      %1222 = vsyncadd [#allocation4], %s1221
      %s1223 = sshll.u32 [#allocation7], 4
      %s1224 = int_to_ptr.vmem [resolvable:$true] %s1223
      %1229 = dma.vmem_to_hbm [thread:$0]  %s1224, 64, %s3, [#allocation4], 32, 32, 2
    $region25: #{tpu_custom_call.1} parent=1 // pred_fallthru
      _
    // Predicated region
    $region26: #{tpu_custom_call.1} parent=1 // pred_check
      _
    $region27: #{tpu_custom_call.1} parent=1 // pred_check_branch
      %1231 = sbr.rel (0) target = $region29
    $region28: #{tpu_custom_call.1} parent=1 // pred_region
      %1232 = dma.done [#allocation4], 64
    $region29: #{tpu_custom_call.1} parent=1 // pred_fallthru
      _
    %1233 = vsyncpa [#allocation3], 1
    %1234 = vsyncpa [#allocation4], 1
    %1235 = vsyncpa [#allocation5], 1

</llo_original>
